<compile_context>
chip_gen: v7x
topology: tpu7x:2x2x1
jax: 0.10.0
libtpu: 0.0.40
codegen_flags: <defaults>
</compile_context>

<pallas_src>
import jax
import jax.numpy as jnp
from jax.experimental import pallas as pl
from jax.experimental.pallas import tpu as pltpu

EPS = 1e-5                  # PyTorch BatchNorm default eps
H1, H2 = 400, 300           # logical hidden sizes (as in the PyTorch module)
S_PAD = 128                 # padded state_dim  (lane-aligned)
H1_PAD, H2_PAD = 512, 384   # padded hidden dims (multiples of 128)
A_PAD = 128                 # padded action_dim (lane-dense output store)


def _batchnorm_train(x, inv_b):
    """BatchNorm1d(affine=False), training mode, biased batch statistics.

    Two passes over x: (1) sum and sum-of-squares in a single traversal,
    (2) fused (x - mean) * inv_std.  Zero-padded feature columns stay exactly
    zero: sum = sumsq = 0 -> mean = var = 0 -> (0 - 0) * rsqrt(eps) = 0.
    """
    s = jnp.sum(x, axis=0, keepdims=True)
    sq = jnp.sum(x * x, axis=0, keepdims=True)
    mean = s * inv_b
    var = jnp.maximum(sq * inv_b - mean * mean, 0.0)   # guard tiny negatives
    inv_std = jax.lax.rsqrt(var + EPS)
    return (x - mean) * inv_std


def actor_kernel(s_ref, w1_ref, b1_ref, w2_ref, b2_ref, w3_ref, b3_ref, o_ref):
    inv_b = 1.0 / s_ref.shape[0]   # static: true batch size (batch is never padded)

    # ---- input batch-norm (f32 math), cast to bf16 to feed the MXU ----
    x = _batchnorm_train(s_ref[...], inv_b).astype(jnp.bfloat16)

    # ---- fc1: bf16 x bf16 -> f32 accumulation, bias + relu + bn in f32 ----
    h1 = jnp.dot(x, w1_ref[...], preferred_element_type=jnp.float32) + b1_ref[...]
    h1 = _batchnorm_train(jnp.maximum(h1, 0.0), inv_b).astype(jnp.bfloat16)

    # ---- fc2 ----
    h2 = jnp.dot(h1, w2_ref[...], preferred_element_type=jnp.float32) + b2_ref[...]
    h2 = _batchnorm_train(jnp.maximum(h2, 0.0), inv_b).astype(jnp.bfloat16)

    # ---- output layer + tanh, lane-dense (B, A_PAD) f32 store ----
    out = jnp.dot(h2, w3_ref[...], preferred_element_type=jnp.float32) + b3_ref[...]
    o_ref[...] = jnp.tanh(out)


def actor_forward(states, w1, b1, w2, b2, w3, b3, action_dim):
    """states: (B, state_dim) f32; weights pre-packed via pack_params().

    Returns (B, action_dim) f32.
    """
    B, sd = states.shape
    assert sd <= S_PAD, "state_dim larger than S_PAD not supported"

    # Lane-dense input: pad state columns to 128.  Zero columns are exactly
    # neutral through BN and the zero-padded rows of w1.
    if sd < S_PAD:
        states = jnp.pad(states, ((0, 0), (0, S_PAD - sd)))

    args = (states, w1, b1, w2, b2, w3, b3)

    def full_spec(arr):
        nd = arr.ndim
        return pl.BlockSpec(arr.shape, lambda i, _nd=nd: (0,) * _nd)

    # Scoped-VMEM budget: double-buffered inputs/outputs + weights + ~16 KB of
    # live activations per batch row, clamped to [16 MiB, 64 MiB] (v7x cap).
    weight_bytes = sum(int(a.size) * a.dtype.itemsize for a in args[1:])
    io_bytes = int(states.size) * 4 + B * A_PAD * 4
    est = 2 * (weight_bytes + io_bytes) + B * (16 << 10) + (2 << 20)
    vmem_limit = int(min(max(est, 16 << 20), 64 << 20))

    out_padded = pl.pallas_call(
        actor_kernel,
        out_shape=jax.ShapeDtypeStruct((B, A_PAD), jnp.float32),
        grid=(1,),
        in_specs=[full_spec(a) for a in args],
        out_specs=pl.BlockSpec((B, A_PAD), lambda i: (0, 0)),
        compiler_params=pltpu.CompilerParams(
            dimension_semantics=("arbitrary",),
            vmem_limit_bytes=vmem_limit,
        ),
    )(*args)

    return out_padded[:, :action_dim]


def init_params(key, state_dim, action_dim):
    """Parameter init mirroring the PyTorch module (logical, unpadded, f32).

    hidden_layer_init(fc): uniform(-1/sqrt(fan_in), 1/sqrt(fan_in))
    output_layer.weight:   uniform(-0.003, 0.003)
    Biases use PyTorch Linear default uniform(-1/sqrt(fan_in), 1/sqrt(fan_in))
    (the module only overrides the output *weight*).
    Weights are produced directly in (in, out) layout.
    """
    ks = jax.random.split(key, 6)
    lim1 = 1.0 / jnp.sqrt(float(state_dim))
    lim2 = 1.0 / jnp.sqrt(float(H1))
    lim3 = 1.0 / jnp.sqrt(float(H2))

    w1 = jax.random.uniform(ks[0], (state_dim, H1), jnp.float32, -lim1, lim1)
    b1 = jax.random.uniform(ks[1], (1, H1), jnp.float32, -lim1, lim1)
    w2 = jax.random.uniform(ks[2], (H1, H2), jnp.float32, -lim2, lim2)
    b2 = jax.random.uniform(ks[3], (1, H2), jnp.float32, -lim2, lim2)
    w3 = jax.random.uniform(ks[4], (H2, action_dim), jnp.float32, -0.003, 0.003)
    b3 = jax.random.uniform(ks[5], (1, action_dim), jnp.float32, -lim3, lim3)
    return w1, b1, w2, b2, w3, b3


def pack_params(w1, b1, w2, b2, w3, b3):
    """One-time packing: zero-pad state/hidden/action dims to lane multiples,
    cast weights to bf16 (biases stay f32, added after f32 accumulation).

    Zero padding is exact for the logical outputs: padded columns are 0 after
    matmul + 0 bias, stay 0 through relu and BN, and multiply zero rows of the
    next weight; padded output columns are sliced off by the wrapper.
    """
    def pad_to(a, shape):
        pads = [(0, t - s) for s, t in zip(a.shape, shape)]
        return jnp.pad(a, pads)

    w1p = pad_to(w1, (S_PAD, H1_PAD)).astype(jnp.bfloat16)
    b1p = pad_to(b1, (1, H1_PAD))
    w2p = pad_to(w2, (H1_PAD, H2_PAD)).astype(jnp.bfloat16)
    b2p = pad_to(b2, (1, H2_PAD))
    w3p = pad_to(w3, (H2_PAD, A_PAD)).astype(jnp.bfloat16)
    b3p = pad_to(b3, (1, A_PAD))
    return w1p, b1p, w2p, b2p, w3p, b3p


def actor_reference(states, w1, b1, w2, b2, w3, b3):
    """Pure-JAX f32 reference (unpadded params) for a sanity check."""
    def bn(x):
        mean = jnp.mean(x, axis=0, keepdims=True)
        var = jnp.mean((x - mean) ** 2, axis=0, keepdims=True)
        return (x - mean) / jnp.sqrt(var + EPS)

    x = bn(states)
    x = bn(jnp.maximum(x @ w1 + b1, 0.0))
    x = bn(jnp.maximum(x @ w2 + b2, 0.0))
    return jnp.tanh(x @ w3 + b3)


if __name__ == "__main__":
    key = jax.random.PRNGKey(0)
    k_states, k_params = jax.random.split(key)

    batch = 16         # small test shape; callers should use multiples of 16, ideally >= 256
    state_dim = 32
    action_dim = 8

    states = jax.random.normal(k_states, (batch, state_dim), jnp.float32)
    params = init_params(k_params, state_dim, action_dim)
    packed = pack_params(*params)

    out = actor_forward(states, *packed, action_dim)
    jax.block_until_ready(out)

    assert out.shape == (batch, action_dim)
    assert out.dtype == jnp.float32
    assert bool(jnp.all(jnp.isfinite(out)))
    assert bool(jnp.all(jnp.abs(out) <= 1.0))   # tanh output range

    # Loose tolerance: bf16 weights / bf16-cast activations vs f32 reference.
    ref = actor_reference(states, *params)
    assert bool(jnp.max(jnp.abs(out - ref)) < 0.1)

    print("KERNEL_OK")
</pallas_src>

<mosaic_0001>
module attributes {stable_mosaic.version = 11 : i64} {
  func.func @actor_kernel(%arg0: i32, %arg1: memref<16x128xf32, #tpu.memory_space<vmem>>, %arg2: memref<128x512xbf16, #tpu.memory_space<vmem>>, %arg3: memref<1x512xf32, #tpu.memory_space<vmem>>, %arg4: memref<512x384xbf16, #tpu.memory_space<vmem>>, %arg5: memref<1x384xf32, #tpu.memory_space<vmem>>, %arg6: memref<384x128xbf16, #tpu.memory_space<vmem>>, %arg7: memref<1x128xf32, #tpu.memory_space<vmem>>, %arg8: memref<16x128xf32, #tpu.memory_space<vmem>>) attributes {dimension_semantics = [#tpu.dimension_semantics<arbitrary>], iteration_bounds = array<i64: 1>, scalar_prefetch = 0 : i64, scratch_operands = 0 : i64, tpu.core_type = #tpu.core_type<tc>, window_params = [{pipeline_mode = #tpu.pipeline_mode<synchronous>, transform_indices = @transform_0, window_bounds = array<i64: 16, 128>}, {pipeline_mode = #tpu.pipeline_mode<synchronous>, transform_indices = @transform_1, window_bounds = array<i64: 128, 512>}, {pipeline_mode = #tpu.pipeline_mode<synchronous>, transform_indices = @transform_2, window_bounds = array<i64: 1, 512>}, {pipeline_mode = #tpu.pipeline_mode<synchronous>, transform_indices = @transform_3, window_bounds = array<i64: 512, 384>}, {pipeline_mode = #tpu.pipeline_mode<synchronous>, transform_indices = @transform_4, window_bounds = array<i64: 1, 384>}, {pipeline_mode = #tpu.pipeline_mode<synchronous>, transform_indices = @transform_5, window_bounds = array<i64: 384, 128>}, {pipeline_mode = #tpu.pipeline_mode<synchronous>, transform_indices = @transform_6, window_bounds = array<i64: 1, 128>}, {pipeline_mode = #tpu.pipeline_mode<synchronous>, transform_indices = @transform_7, window_bounds = array<i64: 16, 128>}]} {
    %c0 = arith.constant 0 : index
    %c0_0 = arith.constant 0 : index
    %0 = vector.load %arg1[%c0, %c0_0] : memref<16x128xf32, #tpu.memory_space<vmem>>, vector<16x128xf32>
    %cst = arith.constant dense<0.000000e+00> : vector<128xf32>
    %1 = vector.multi_reduction <add>, %0, %cst [0] : vector<16x128xf32> to vector<128xf32>
    %2 = vector.shape_cast %1 : vector<128xf32> to vector<1x128xf32>
    %3 = arith.mulf %0, %0 : vector<16x128xf32>
    %cst_1 = arith.constant dense<0.000000e+00> : vector<128xf32>
    %4 = vector.multi_reduction <add>, %3, %cst_1 [0] : vector<16x128xf32> to vector<128xf32>
    %5 = vector.shape_cast %4 : vector<128xf32> to vector<1x128xf32>
    %cst_2 = arith.constant 6.250000e-02 : f32
    %6 = vector.broadcast %cst_2 : f32 to vector<1x128xf32>
    %7 = arith.mulf %2, %6 : vector<1x128xf32>
    %cst_3 = arith.constant 6.250000e-02 : f32
    %8 = vector.broadcast %cst_3 : f32 to vector<1x128xf32>
    %9 = arith.mulf %5, %8 : vector<1x128xf32>
    %10 = arith.mulf %7, %7 : vector<1x128xf32>
    %11 = arith.subf %9, %10 : vector<1x128xf32>
    %cst_4 = arith.constant 0.000000e+00 : f32
    %12 = vector.broadcast %cst_4 : f32 to vector<1x128xf32>
    %13 = arith.maximumf %11, %12 : vector<1x128xf32>
    %cst_5 = arith.constant 9.99999974E-6 : f32
    %14 = vector.broadcast %cst_5 : f32 to vector<1x128xf32>
    %15 = arith.addf %13, %14 : vector<1x128xf32>
    %16 = math.rsqrt %15 : vector<1x128xf32>
    %17 = vector.broadcast %7 : vector<1x128xf32> to vector<16x128xf32>
    %18 = arith.subf %0, %17 : vector<16x128xf32>
    %19 = vector.broadcast %16 : vector<1x128xf32> to vector<16x128xf32>
    %20 = arith.mulf %18, %19 : vector<16x128xf32>
    %21 = arith.truncf %20 : vector<16x128xf32> to vector<16x128xbf16>
    %c0_6 = arith.constant 0 : index
    %c0_7 = arith.constant 0 : index
    %22 = vector.load %arg2[%c0_6, %c0_7] : memref<128x512xbf16, #tpu.memory_space<vmem>>, vector<128x512xbf16>
    %cst_8 = arith.constant dense<0.000000e+00> : vector<16x512xf32>
    %23 = tpu.matmul %21, %22, %cst_8 {dimension_numbers = #tpu.dot_dimension_numbers<[1], [0], [0], [1], [0, 0, 1, 1], [], []>} : vector<16x128xbf16>, vector<128x512xbf16>, vector<16x512xf32> -> vector<16x512xf32>
    %c0_9 = arith.constant 0 : index
    %c0_10 = arith.constant 0 : index
    %24 = vector.load %arg3[%c0_9, %c0_10] : memref<1x512xf32, #tpu.memory_space<vmem>>, vector<1x512xf32>
    %25 = vector.broadcast %24 : vector<1x512xf32> to vector<16x512xf32>
    %26 = arith.addf %23, %25 : vector<16x512xf32>
    %cst_11 = arith.constant 0.000000e+00 : f32
    %27 = vector.broadcast %cst_11 : f32 to vector<16x512xf32>
    %28 = arith.maximumf %26, %27 : vector<16x512xf32>
    %cst_12 = arith.constant dense<0.000000e+00> : vector<512xf32>
    %29 = vector.multi_reduction <add>, %28, %cst_12 [0] : vector<16x512xf32> to vector<512xf32>
    %30 = vector.shape_cast %29 : vector<512xf32> to vector<1x512xf32>
    %31 = arith.mulf %28, %28 : vector<16x512xf32>
    %cst_13 = arith.constant dense<0.000000e+00> : vector<512xf32>
    %32 = vector.multi_reduction <add>, %31, %cst_13 [0] : vector<16x512xf32> to vector<512xf32>
    %33 = vector.shape_cast %32 : vector<512xf32> to vector<1x512xf32>
    %cst_14 = arith.constant 6.250000e-02 : f32
    %34 = vector.broadcast %cst_14 : f32 to vector<1x512xf32>
    %35 = arith.mulf %30, %34 : vector<1x512xf32>
    %cst_15 = arith.constant 6.250000e-02 : f32
    %36 = vector.broadcast %cst_15 : f32 to vector<1x512xf32>
    %37 = arith.mulf %33, %36 : vector<1x512xf32>
    %38 = arith.mulf %35, %35 : vector<1x512xf32>
    %39 = arith.subf %37, %38 : vector<1x512xf32>
    %cst_16 = arith.constant 0.000000e+00 : f32
    %40 = vector.broadcast %cst_16 : f32 to vector<1x512xf32>
    %41 = arith.maximumf %39, %40 : vector<1x512xf32>
    %cst_17 = arith.constant 9.99999974E-6 : f32
    %42 = vector.broadcast %cst_17 : f32 to vector<1x512xf32>
    %43 = arith.addf %41, %42 : vector<1x512xf32>
    %44 = math.rsqrt %43 : vector<1x512xf32>
    %45 = vector.broadcast %35 : vector<1x512xf32> to vector<16x512xf32>
    %46 = arith.subf %28, %45 : vector<16x512xf32>
    %47 = vector.broadcast %44 : vector<1x512xf32> to vector<16x512xf32>
    %48 = arith.mulf %46, %47 : vector<16x512xf32>
    %49 = arith.truncf %48 : vector<16x512xf32> to vector<16x512xbf16>
    %c0_18 = arith.constant 0 : index
    %c0_19 = arith.constant 0 : index
    %50 = vector.load %arg4[%c0_18, %c0_19] : memref<512x384xbf16, #tpu.memory_space<vmem>>, vector<512x384xbf16>
    %cst_20 = arith.constant dense<0.000000e+00> : vector<16x384xf32>
    %51 = tpu.matmul %49, %50, %cst_20 {dimension_numbers = #tpu.dot_dimension_numbers<[1], [0], [0], [1], [0, 0, 1, 1], [], []>} : vector<16x512xbf16>, vector<512x384xbf16>, vector<16x384xf32> -> vector<16x384xf32>
    %c0_21 = arith.constant 0 : index
    %c0_22 = arith.constant 0 : index
    %52 = vector.load %arg5[%c0_21, %c0_22] : memref<1x384xf32, #tpu.memory_space<vmem>>, vector<1x384xf32>
    %53 = vector.broadcast %52 : vector<1x384xf32> to vector<16x384xf32>
    %54 = arith.addf %51, %53 : vector<16x384xf32>
    %cst_23 = arith.constant 0.000000e+00 : f32
    %55 = vector.broadcast %cst_23 : f32 to vector<16x384xf32>
    %56 = arith.maximumf %54, %55 : vector<16x384xf32>
    %cst_24 = arith.constant dense<0.000000e+00> : vector<384xf32>
    %57 = vector.multi_reduction <add>, %56, %cst_24 [0] : vector<16x384xf32> to vector<384xf32>
    %58 = vector.shape_cast %57 : vector<384xf32> to vector<1x384xf32>
    %59 = arith.mulf %56, %56 : vector<16x384xf32>
    %cst_25 = arith.constant dense<0.000000e+00> : vector<384xf32>
    %60 = vector.multi_reduction <add>, %59, %cst_25 [0] : vector<16x384xf32> to vector<384xf32>
    %61 = vector.shape_cast %60 : vector<384xf32> to vector<1x384xf32>
    %cst_26 = arith.constant 6.250000e-02 : f32
    %62 = vector.broadcast %cst_26 : f32 to vector<1x384xf32>
    %63 = arith.mulf %58, %62 : vector<1x384xf32>
    %cst_27 = arith.constant 6.250000e-02 : f32
    %64 = vector.broadcast %cst_27 : f32 to vector<1x384xf32>
    %65 = arith.mulf %61, %64 : vector<1x384xf32>
    %66 = arith.mulf %63, %63 : vector<1x384xf32>
    %67 = arith.subf %65, %66 : vector<1x384xf32>
    %cst_28 = arith.constant 0.000000e+00 : f32
    %68 = vector.broadcast %cst_28 : f32 to vector<1x384xf32>
    %69 = arith.maximumf %67, %68 : vector<1x384xf32>
    %cst_29 = arith.constant 9.99999974E-6 : f32
    %70 = vector.broadcast %cst_29 : f32 to vector<1x384xf32>
    %71 = arith.addf %69, %70 : vector<1x384xf32>
    %72 = math.rsqrt %71 : vector<1x384xf32>
    %73 = vector.broadcast %63 : vector<1x384xf32> to vector<16x384xf32>
    %74 = arith.subf %56, %73 : vector<16x384xf32>
    %75 = vector.broadcast %72 : vector<1x384xf32> to vector<16x384xf32>
    %76 = arith.mulf %74, %75 : vector<16x384xf32>
    %77 = arith.truncf %76 : vector<16x384xf32> to vector<16x384xbf16>
    %c0_30 = arith.constant 0 : index
    %c0_31 = arith.constant 0 : index
    %78 = vector.load %arg6[%c0_30, %c0_31] : memref<384x128xbf16, #tpu.memory_space<vmem>>, vector<384x128xbf16>
    %cst_32 = arith.constant dense<0.000000e+00> : vector<16x128xf32>
    %79 = tpu.matmul %77, %78, %cst_32 {dimension_numbers = #tpu.dot_dimension_numbers<[1], [0], [0], [1], [0, 0, 1, 1], [], []>} : vector<16x384xbf16>, vector<384x128xbf16>, vector<16x128xf32> -> vector<16x128xf32>
    %c0_33 = arith.constant 0 : index
    %c0_34 = arith.constant 0 : index
    %80 = vector.load %arg7[%c0_33, %c0_34] : memref<1x128xf32, #tpu.memory_space<vmem>>, vector<1x128xf32>
    %81 = vector.broadcast %80 : vector<1x128xf32> to vector<16x128xf32>
    %82 = arith.addf %79, %81 : vector<16x128xf32>
    %83 = math.tanh %82 : vector<16x128xf32>
    %c0_35 = arith.constant 0 : index
    %c0_36 = arith.constant 0 : index
    %84 = vector.load %arg8[%c0_35, %c0_36] : memref<16x128xf32, #tpu.memory_space<vmem>>, vector<16x128xf32>
    tpu.vector_store %arg8[%c0_35, %c0_36], %83 {strides = array<i32>} : memref<16x128xf32, #tpu.memory_space<vmem>>, vector<16x128xf32>,
    return
  }
  func.func @transform_0(%arg0: i32) -> (i32, i32) {
    %c0_i32 = arith.constant 0 : i32
    %c0_i32_0 = arith.constant 0 : i32
    %c0_i32_1 = arith.constant 0 : i32
    return %c0_i32, %c0_i32_0 : i32, i32
  }
  func.func @transform_1(%arg0: i32) -> (i32, i32) {
    %c0_i32 = arith.constant 0 : i32
    %c0_i32_0 = arith.constant 0 : i32
    %c0_i32_1 = arith.constant 0 : i32
    return %c0_i32, %c0_i32_0 : i32, i32
  }
  func.func @transform_2(%arg0: i32) -> (i32, i32) {
    %c0_i32 = arith.constant 0 : i32
    %c0_i32_0 = arith.constant 0 : i32
    %c0_i32_1 = arith.constant 0 : i32
    return %c0_i32, %c0_i32_0 : i32, i32
  }
  func.func @transform_3(%arg0: i32) -> (i32, i32) {
    %c0_i32 = arith.constant 0 : i32
    %c0_i32_0 = arith.constant 0 : i32
    %c0_i32_1 = arith.constant 0 : i32
    return %c0_i32, %c0_i32_0 : i32, i32
  }
  func.func @transform_4(%arg0: i32) -> (i32, i32) {
    %c0_i32 = arith.constant 0 : i32
    %c0_i32_0 = arith.constant 0 : i32
    %c0_i32_1 = arith.constant 0 : i32
    return %c0_i32, %c0_i32_0 : i32, i32
  }
  func.func @transform_5(%arg0: i32) -> (i32, i32) {
    %c0_i32 = arith.constant 0 : i32
    %c0_i32_0 = arith.constant 0 : i32
    %c0_i32_1 = arith.constant 0 : i32
    return %c0_i32, %c0_i32_0 : i32, i32
  }
  func.func @transform_6(%arg0: i32) -> (i32, i32) {
    %c0_i32 = arith.constant 0 : i32
    %c0_i32_0 = arith.constant 0 : i32
    %c0_i32_1 = arith.constant 0 : i32
    return %c0_i32, %c0_i32_0 : i32, i32
  }
  func.func @transform_7(%arg0: i32) -> (i32, i32) {
    %c0_i32 = arith.constant 0 : i32
    %c0_i32_0 = arith.constant 0 : i32
    %c0_i32_1 = arith.constant 0 : i32
    return %c0_i32, %c0_i32_0 : i32, i32
  }
}

</mosaic_0001>

<llo_original>
// kernel: tpu_custom_call.1
$region0: #{tpu_custom_call.1}
  #allocation0 [shape = 'u32[]', space=smem, size = 0x4, offset = 0x4, fixed_abs, tag = 'smem constant byte address 0x4 - core index']
  #allocation1 [shape = 'u32[144,128]{1,0:T(1,128)}', space=vmem, size = 0x12000, scoped, tag = 'internal scratch']
  %s0 = inlined_call_operand.hbm [shape: f32[16,128], index: 0, kind: input, shape index: {}]
  %s1 = inlined_call_operand.hbm [shape: bf16[128,512], index: 1, kind: input, shape index: {}]
  %s2 = inlined_call_operand.vmem [shape: f32[1,512], index: 2, kind: input, shape index: {}]
  %s3 = inlined_call_operand.hbm [shape: bf16[512,384], index: 3, kind: input, shape index: {}]
  %s4 = inlined_call_operand.vmem [shape: f32[1,384], index: 4, kind: input, shape index: {}]
  %s5 = inlined_call_operand.hbm [shape: bf16[384,128], index: 5, kind: input, shape index: {}]
  %s6 = inlined_call_operand.vmem [shape: f32[1,128], index: 6, kind: input, shape index: {}]
  %s7 = inlined_call_operand.hbm [shape: f32[16,128], index: 7, kind: output, shape index: {}]
  %s8 = sld [smem:[#allocation0]]
  $region54: #{tpu_custom_call.1} parent=0
    _
  %s10 = ssub.s32 1, %s8
  %s11 = scalar_select 0, %s10, %s8
  $region1: #{tpu_custom_call.1} parent=0
    #allocation2 [shape = 'u8[8192]{0}', space=vmem, size = 0x2000, scoped, tag = 'input window, operand 0, single buffered']
    #allocation3 [shape = 's32[1]{0}', space=sflag, size = 0x4, scoped, tag = 'scoped memory for tpu_custom_call.1']
    #allocation4 [shape = 's32[1]{0}', space=sflag, size = 0x4, scoped, tag = 'scoped memory for tpu_custom_call.1']
    #allocation5 [shape = 'u8[131072]{0}', space=vmem, size = 0x20000, scoped, tag = 'input window, operand 1, single buffered']
    #allocation6 [shape = 's32[1]{0}', space=sflag, size = 0x4, scoped, tag = 'scoped memory for tpu_custom_call.1']
    #allocation7 [shape = 'u8[393216]{0}', space=vmem, size = 0x60000, scoped, tag = 'input window, operand 3, single buffered']
    #allocation8 [shape = 'u8[98304]{0}', space=vmem, size = 0x18000, scoped, tag = 'input window, operand 5, single buffered']
    #allocation9 [shape = 's32[1]{0}', space=sflag, size = 0x4, scoped, tag = 'scoped memory for tpu_custom_call.1']
    #allocation10 [shape = 'u8[8192]{0}', space=vmem, size = 0x2000, scoped, tag = 'output window, operand 0, single buffered']
    %12 = vsyncpa [#allocation3], 0
    %13 = vsyncpa [#allocation6], 0
    %14 = vsyncpa [#allocation9], 0
    %15 = vsyncpa [#allocation4], 0
    // Predicated region
    $region2: #{tpu_custom_call.1} parent=1 // pred_check
      _
    $region3: #{tpu_custom_call.1} parent=1 // pred_check_branch
      %17 = sbr.rel (0) target = $region5
    $region4: #{tpu_custom_call.1} parent=1 // pred_region
      %s19 = ssub.s32 256, 256
      %20 = vsyncadd [#allocation3], %s19
      %s21 = sshll.u32 [#allocation2], 4
      %s22 = int_to_ptr.vmem [resolvable:$true] %s21
      %27 = dma.hbm_to_vmem [thread:$0]  %s0, 256, %s22, [#allocation3], 128, 128, 8
    $region5: #{tpu_custom_call.1} parent=1 // pred_fallthru
      _
    // Predicated region
    $region6: #{tpu_custom_call.1} parent=1 // pred_check
      _
    $region7: #{tpu_custom_call.1} parent=1 // pred_check_branch
      %29 = sbr.rel (0) target = $region9
    $region8: #{tpu_custom_call.1} parent=1 // pred_region
      %s31 = ssub.s32 4096, 4096
      %32 = vsyncadd [#allocation6], %s31
      %s33 = sshll.u32 [#allocation5], 4
      %s34 = int_to_ptr.vmem [resolvable:$true] %s33
      %39 = dma.hbm_to_vmem [thread:$0]  %s1, 4096, %s34, [#allocation6], 256, 256, 16
    $region9: #{tpu_custom_call.1} parent=1 // pred_fallthru
      _
    // Predicated region
    $region10: #{tpu_custom_call.1} parent=1 // pred_check
      _
    $region11: #{tpu_custom_call.1} parent=1 // pred_check_branch
      %41 = sbr.rel (0) target = $region13
    $region12: #{tpu_custom_call.1} parent=1 // pred_region
      _
    $region13: #{tpu_custom_call.1} parent=1 // pred_fallthru
      _
    // Predicated region
    $region14: #{tpu_custom_call.1} parent=1 // pred_check
      _
    $region15: #{tpu_custom_call.1} parent=1 // pred_check_branch
      %43 = sbr.rel (0) target = $region17
    $region16: #{tpu_custom_call.1} parent=1 // pred_region
      %s45 = ssub.s32 12288, 12288
      %46 = vsyncadd [#allocation6], %s45
      %s47 = sshll.u32 [#allocation7], 4
      %s48 = int_to_ptr.vmem [resolvable:$true] %s47
      %53 = dma.hbm_to_vmem [thread:$0]  %s3, 12288, %s48, [#allocation6], 192, 192, 12
    $region17: #{tpu_custom_call.1} parent=1 // pred_fallthru
      _
    // Predicated region
    $region18: #{tpu_custom_call.1} parent=1 // pred_check
      _
    $region19: #{tpu_custom_call.1} parent=1 // pred_check_branch
      %55 = sbr.rel (0) target = $region21
    $region20: #{tpu_custom_call.1} parent=1 // pred_region
      _
    $region21: #{tpu_custom_call.1} parent=1 // pred_fallthru
      _
    // Predicated region
    $region22: #{tpu_custom_call.1} parent=1 // pred_check
      _
    $region23: #{tpu_custom_call.1} parent=1 // pred_check_branch
      %57 = sbr.rel (0) target = $region25
    $region24: #{tpu_custom_call.1} parent=1 // pred_region
      %s59 = ssub.s32 3072, 3072
      %60 = vsyncadd [#allocation9], %s59
      %s61 = sshll.u32 [#allocation8], 4
      %s62 = int_to_ptr.vmem [resolvable:$true] %s61
      %67 = dma.hbm_to_vmem [thread:$0]  %s5, 3072, %s62, [#allocation9], 64, 64, 4
    $region25: #{tpu_custom_call.1} parent=1 // pred_fallthru
      _
    // Predicated region
    $region26: #{tpu_custom_call.1} parent=1 // pred_check
      _
    $region27: #{tpu_custom_call.1} parent=1 // pred_check_branch
      %69 = sbr.rel (0) target = $region29
    $region28: #{tpu_custom_call.1} parent=1 // pred_region
      _
    $region29: #{tpu_custom_call.1} parent=1 // pred_fallthru
      _
    // Predicated region
    $region30: #{tpu_custom_call.1} parent=1 // pred_check
      _
    $region31: #{tpu_custom_call.1} parent=1 // pred_check_branch
      %71 = sbr.rel (0) target = $region33
    $region32: #{tpu_custom_call.1} parent=1 // pred_region
      %72 = dma.done [#allocation3], 256
    $region33: #{tpu_custom_call.1} parent=1 // pred_fallthru
      _
    // Predicated region
    $region34: #{tpu_custom_call.1} parent=1 // pred_check
      _
    $region35: #{tpu_custom_call.1} parent=1 // pred_check_branch
      %74 = sbr.rel (0) target = $region37
    $region36: #{tpu_custom_call.1} parent=1 // pred_region
      %75 = dma.done [#allocation6], 4096
    $region37: #{tpu_custom_call.1} parent=1 // pred_fallthru
      _
    // Predicated region
    $region38: #{tpu_custom_call.1} parent=1 // pred_check
      _
    $region39: #{tpu_custom_call.1} parent=1 // pred_check_branch
      %77 = sbr.rel (0) target = $region41
    $region40: #{tpu_custom_call.1} parent=1 // pred_region
      %78 = dma.done [#allocation6], 12288
    $region41: #{tpu_custom_call.1} parent=1 // pred_fallthru
      _
    // Predicated region
    $region42: #{tpu_custom_call.1} parent=1 // pred_check
      _
    $region43: #{tpu_custom_call.1} parent=1 // pred_check_branch
      %80 = sbr.rel (0) target = $region45
    $region44: #{tpu_custom_call.1} parent=1 // pred_region
      %81 = dma.done [#allocation9], 3072
    $region45: #{tpu_custom_call.1} parent=1 // pred_fallthru
      _
    %v83 = vld [vmem:[#allocation2] sm:$0xff]
    %v84 = vld [vmem:[#allocation2 + $0x8] sm:$0xff]
    %v85 = vadd.f32 %v83, %v84
    %v86 = vrot.slane %v85, 4
    %v87 = vadd.f32 %v85, %v86
    %v88 = vrot.slane %v87, 2
    %v89 = vadd.f32 %v87, %v88
    %v90 = vrot.slane %v89, 1
    %v91 = vadd.f32 %v89, %v90
    %v92 = vmul.f32 %v83, %v83
    %v93 = vmul.f32 %v84, %v84
    %v94 = vadd.f32 %v92, %v93
    %v95 = vrot.slane %v94, 4
    %v96 = vadd.f32 %v94, %v95
    %v97 = vrot.slane %v96, 2
    %v98 = vadd.f32 %v96, %v97
    %v99 = vrot.slane %v98, 1
    %v100 = vadd.f32 %v98, %v99
    %v101 = vmul.f32 %v91, 0.0625
    %v102 = vmul.f32 %v100, 0.0625
    %v103 = vmul.f32 %v101, %v101
    %v104 = vsub.f32 %v102, %v103
    %v105 = vmax.f32 %v104, 0.0
    %v106 = vadd.f32 %v105, 1e-05
    %v107 = vrsqrt.pop %v106
    %v108 = vsub.f32 %v83, %v101
    %v109 = vsub.f32 %v84, %v101
    %v110 = vmul.f32 %v108, %v107
    %v111 = vmul.f32 %v109, %v107
    %v112 = vpack.c.bf16 %v111, %v110
    %v113 = vld [vmem:[#allocation5] sm:$0xff]
    %v114 = vld [vmem:[#allocation5 + $0x8] sm:$0xff]
    %v115 = vld [vmem:[#allocation5 + $0x10] sm:$0xff]
    %v116 = vld [vmem:[#allocation5 + $0x18] sm:$0xff]
    %v117 = vld [vmem:[#allocation5 + $0x20] sm:$0xff]
    %v118 = vld [vmem:[#allocation5 + $0x28] sm:$0xff]
    %v119 = vld [vmem:[#allocation5 + $0x30] sm:$0xff]
    %v120 = vld [vmem:[#allocation5 + $0x38] sm:$0xff]
    %v121 = vld [vmem:[#allocation5 + $0x40] sm:$0xff]
    %v122 = vld [vmem:[#allocation5 + $0x48] sm:$0xff]
    %v123 = vld [vmem:[#allocation5 + $0x50] sm:$0xff]
    %v124 = vld [vmem:[#allocation5 + $0x58] sm:$0xff]
    %v125 = vld [vmem:[#allocation5 + $0x60] sm:$0xff]
    %v126 = vld [vmem:[#allocation5 + $0x68] sm:$0xff]
    %v127 = vld [vmem:[#allocation5 + $0x70] sm:$0xff]
    %v128 = vld [vmem:[#allocation5 + $0x78] sm:$0xff]
    %v129 = vld [vmem:[#allocation5 + $0x80] sm:$0xff]
    %v130 = vld [vmem:[#allocation5 + $0x88] sm:$0xff]
    %v131 = vld [vmem:[#allocation5 + $0x90] sm:$0xff]
    %v132 = vld [vmem:[#allocation5 + $0x98] sm:$0xff]
    %v133 = vld [vmem:[#allocation5 + $0xa0] sm:$0xff]
    %v134 = vld [vmem:[#allocation5 + $0xa8] sm:$0xff]
    %v135 = vld [vmem:[#allocation5 + $0xb0] sm:$0xff]
    %v136 = vld [vmem:[#allocation5 + $0xb8] sm:$0xff]
    %v137 = vld [vmem:[#allocation5 + $0xc0] sm:$0xff]
    %v138 = vld [vmem:[#allocation5 + $0xc8] sm:$0xff]
    %v139 = vld [vmem:[#allocation5 + $0xd0] sm:$0xff]
    %v140 = vld [vmem:[#allocation5 + $0xd8] sm:$0xff]
    %v141 = vld [vmem:[#allocation5 + $0xe0] sm:$0xff]
    %v142 = vld [vmem:[#allocation5 + $0xe8] sm:$0xff]
    %v143 = vld [vmem:[#allocation5 + $0xf0] sm:$0xff]
    %v144 = vld [vmem:[#allocation5 + $0xf8] sm:$0xff]
    %v145 = vld [vmem:[%s2] sm:$0xf]
    %v147 = vlaneseq
    %v148 = vshrl.u32 %v147, 7
    %v149 = vsub.s32 0, %v148
    %v150 = vrot.slane %v145, %v149
    %v151 = vlaneseq
    %v152 = vshrl.u32 %v151, 7
    %v153 = vsub.s32 1, %v152
    %v154 = vrot.slane %v145, %v153
    %v155 = vlaneseq
    %v156 = vshrl.u32 %v155, 7
    %v157 = vsub.s32 2, %v156
    %v158 = vrot.slane %v145, %v157
    %v159 = vlaneseq
    %v160 = vshrl.u32 %v159, 7
    %v161 = vsub.s32 3, %v160
    %v162 = vrot.slane %v145, %v161
    %v199 = vunpack.c.l.b16 %v113
    %v200 = vunpack.c.h.b16 %v113
    %v201 = vunpack.c.l.b16 %v114
    %v202 = vunpack.c.h.b16 %v114
    %v203 = vunpack.c.l.b16 %v115
    %v204 = vunpack.c.h.b16 %v115
    %v205 = vunpack.c.l.b16 %v116
    %v206 = vunpack.c.h.b16 %v116
    %v207 = vunpack.c.l.b16 %v117
    %v208 = vunpack.c.h.b16 %v117
    %v209 = vunpack.c.l.b16 %v118
    %v210 = vunpack.c.h.b16 %v118
    %v211 = vunpack.c.l.b16 %v119
    %v212 = vunpack.c.h.b16 %v119
    %v213 = vunpack.c.l.b16 %v120
    %v214 = vunpack.c.h.b16 %v120
    %v215 = vunpack.c.l.b16 %v121
    %v216 = vunpack.c.h.b16 %v121
    %v217 = vunpack.c.l.b16 %v122
    %v218 = vunpack.c.h.b16 %v122
    %v219 = vunpack.c.l.b16 %v123
    %v220 = vunpack.c.h.b16 %v123
    %v221 = vunpack.c.l.b16 %v124
    %v222 = vunpack.c.h.b16 %v124
    %v223 = vunpack.c.l.b16 %v125
    %v224 = vunpack.c.h.b16 %v125
    %v225 = vunpack.c.l.b16 %v126
    %v226 = vunpack.c.h.b16 %v126
    %v227 = vunpack.c.l.b16 %v127
    %v228 = vunpack.c.h.b16 %v127
    %v229 = vunpack.c.l.b16 %v128
    %v230 = vunpack.c.h.b16 %v128
    %v231 = vunpack.c.l.b16 %v129
    %v232 = vunpack.c.h.b16 %v129
    %v233 = vunpack.c.l.b16 %v130
    %v234 = vunpack.c.h.b16 %v130
    %v235 = vunpack.c.l.b16 %v131
    %v236 = vunpack.c.h.b16 %v131
    %v237 = vunpack.c.l.b16 %v132
    %v238 = vunpack.c.h.b16 %v132
    %v239 = vunpack.c.l.b16 %v133
    %v240 = vunpack.c.h.b16 %v133
    %v241 = vunpack.c.l.b16 %v134
    %v242 = vunpack.c.h.b16 %v134
    %v243 = vunpack.c.l.b16 %v135
    %v244 = vunpack.c.h.b16 %v135
    %v245 = vunpack.c.l.b16 %v136
    %v246 = vunpack.c.h.b16 %v136
    %v247 = vunpack.c.l.b16 %v137
    %v248 = vunpack.c.h.b16 %v137
    %v249 = vunpack.c.l.b16 %v138
    %v250 = vunpack.c.h.b16 %v138
    %v251 = vunpack.c.l.b16 %v139
    %v252 = vunpack.c.h.b16 %v139
    %v253 = vunpack.c.l.b16 %v140
    %v254 = vunpack.c.h.b16 %v140
    %v255 = vunpack.c.l.b16 %v141
    %v256 = vunpack.c.h.b16 %v141
    %v257 = vunpack.c.l.b16 %v142
    %v258 = vunpack.c.h.b16 %v142
    %v259 = vunpack.c.l.b16 %v143
    %v260 = vunpack.c.h.b16 %v143
    %v261 = vunpack.c.l.b16 %v144
    %v262 = vunpack.c.h.b16 %v144
    %v263 = vpack.c.b16 %v203, %v199
    %v264 = vpack.c.b16 %v204, %v200
    %v265 = vpack.c.b16 %v205, %v201
    %v266 = vpack.c.b16 %v206, %v202
    %v267 = vpack.c.b16 %v211, %v207
    %v268 = vpack.c.b16 %v212, %v208
    %v269 = vpack.c.b16 %v213, %v209
    %v270 = vpack.c.b16 %v214, %v210
    %v271 = vpack.c.b16 %v219, %v215
    %v272 = vpack.c.b16 %v220, %v216
    %v273 = vpack.c.b16 %v221, %v217
    %v274 = vpack.c.b16 %v222, %v218
    %v275 = vpack.c.b16 %v227, %v223
    %v276 = vpack.c.b16 %v228, %v224
    %v277 = vpack.c.b16 %v229, %v225
    %v278 = vpack.c.b16 %v230, %v226
    %v279 = vpack.c.b16 %v235, %v231
    %v280 = vpack.c.b16 %v236, %v232
    %v281 = vpack.c.b16 %v237, %v233
    %v282 = vpack.c.b16 %v238, %v234
    %v283 = vpack.c.b16 %v243, %v239
    %v284 = vpack.c.b16 %v244, %v240
    %v285 = vpack.c.b16 %v245, %v241
    %v286 = vpack.c.b16 %v246, %v242
    %v287 = vpack.c.b16 %v251, %v247
    %v288 = vpack.c.b16 %v252, %v248
    %v289 = vpack.c.b16 %v253, %v249
    %v290 = vpack.c.b16 %v254, %v250
    %v291 = vpack.c.b16 %v259, %v255
    %v292 = vpack.c.b16 %v260, %v256
    %v293 = vpack.c.b16 %v261, %v257
    %v294 = vpack.c.b16 %v262, %v258
    %327 = vmatprep.subr.bf16.mxu0 %v264
    %328 = vmatpush1.bf16.msra.mxu0 %v263
    %329 = vmatprep.subr.bf16.mxu0 %v268
    %330 = vmatpush1.bf16.msra.mxu0 %v267
    %331 = vmatprep.subr.bf16.mxu0 %v272
    %332 = vmatpush1.bf16.msra.mxu0 %v271
    %333 = vmatprep.subr.bf16.mxu0 %v276
    %334 = vmatpush1.bf16.msra.mxu0 %v275
    %335 = vmatprep.subr.bf16.mxu0 %v280
    %336 = vmatpush1.bf16.msra.mxu0 %v279
    %337 = vmatprep.subr.bf16.mxu0 %v284
    %338 = vmatpush1.bf16.msra.mxu0 %v283
    %339 = vmatprep.subr.bf16.mxu0 %v288
    %340 = vmatpush1.bf16.msra.mxu0 %v287
    %341 = vmatprep.subr.bf16.mxu0 %v292
    %342 = vmatpush1.bf16.msra.mxu0 %v291
    %343 = vmatprep.subr.bf16.mxu0 0
    %344 = vmatpush1.bf16.msra.mxu0 0
    %345 = vmatprep.subr.bf16.mxu0 0
    %346 = vmatpush1.bf16.msra.mxu0 0
    %347 = vmatprep.subr.bf16.mxu0 0
    %348 = vmatpush1.bf16.msra.mxu0 0
    %349 = vmatprep.subr.bf16.mxu0 0
    %350 = vmatpush1.bf16.msra.mxu0 0
    %351 = vmatprep.subr.bf16.mxu0 0
    %352 = vmatpush1.bf16.msra.mxu0 0
    %353 = vmatprep.subr.bf16.mxu0 0
    %354 = vmatpush1.bf16.msra.mxu0 0
    %355 = vmatprep.subr.bf16.mxu0 0
    %356 = vmatpush1.bf16.msra.mxu0 0
    %357 = vmatprep.subr.bf16.mxu0 0
    %358 = vmatpush1.bf16.msra.mxu0 0
    %359 = vmatprep.mubr.bf16.mxu0 0
    %360 = vmatmul.mubr.bf16.gmra.mrb[0].mxu0 %v112
    %v361 = vpop.f32.mrb[0].mxu0
    %v362 = vadd.f32 %v150, %v361
    %v363 = vpop.f32.mrb[0].mxu0
    %v364 = vadd.f32 %v154, %v363
    %v365 = vpop.f32.mrb[0].mxu0
    %v366 = vadd.f32 %v150, %v365
    %v367 = vpop.f32.mrb[0].mxu0
    %v368 = vadd.f32 %v154, %v367
    %369 = vdwg.mxu0
    %370 = vmatprep.subr.bf16.mxu0 %v266
    %371 = vmatpush1.bf16.msra.mxu0 %v265
    %372 = vmatprep.subr.bf16.mxu0 %v270
    %373 = vmatpush1.bf16.msra.mxu0 %v269
    %374 = vmatprep.subr.bf16.mxu0 %v274
    %375 = vmatpush1.bf16.msra.mxu0 %v273
    %376 = vmatprep.subr.bf16.mxu0 %v278
    %377 = vmatpush1.bf16.msra.mxu0 %v277
    %378 = vmatprep.subr.bf16.mxu0 %v282
    %379 = vmatpush1.bf16.msra.mxu0 %v281
    %380 = vmatprep.subr.bf16.mxu0 %v286
    %381 = vmatpush1.bf16.msra.mxu0 %v285
    %382 = vmatprep.subr.bf16.mxu0 %v290
    %383 = vmatpush1.bf16.msra.mxu0 %v289
    %384 = vmatprep.subr.bf16.mxu0 %v294
    %385 = vmatpush1.bf16.msra.mxu0 %v293
    %386 = vmatprep.subr.bf16.mxu0 0
    %387 = vmatpush1.bf16.msra.mxu0 0
    %388 = vmatprep.subr.bf16.mxu0 0
    %389 = vmatpush1.bf16.msra.mxu0 0
    %390 = vmatprep.subr.bf16.mxu0 0
    %391 = vmatpush1.bf16.msra.mxu0 0
    %392 = vmatprep.subr.bf16.mxu0 0
    %393 = vmatpush1.bf16.msra.mxu0 0
    %394 = vmatprep.subr.bf16.mxu0 0
    %395 = vmatpush1.bf16.msra.mxu0 0
    %396 = vmatprep.subr.bf16.mxu0 0
    %397 = vmatpush1.bf16.msra.mxu0 0
    %398 = vmatprep.subr.bf16.mxu0 0
    %399 = vmatpush1.bf16.msra.mxu0 0
    %400 = vmatprep.subr.bf16.mxu0 0
    %401 = vmatpush1.bf16.msra.mxu0 0
    %402 = vmatprep.mubr.bf16.mxu0 0
    %403 = vmatmul.mubr.bf16.gmra.mrb[0].mxu0 %v112
    %v404 = vpop.f32.mrb[0].mxu0
    %v405 = vadd.f32 %v158, %v404
    %v406 = vpop.f32.mrb[0].mxu0
    %v407 = vadd.f32 %v162, %v406
    %v408 = vpop.f32.mrb[0].mxu0
    %v409 = vadd.f32 %v158, %v408
    %v410 = vpop.f32.mrb[0].mxu0
    %v411 = vadd.f32 %v162, %v410
    %412 = vdwg.mxu0
    %v413 = vmax.f32 %v362, 0.0
    %v414 = vmax.f32 %v364, 0.0
    %v415 = vmax.f32 %v405, 0.0
    %v416 = vmax.f32 %v407, 0.0
    %v417 = vmax.f32 %v366, 0.0
    %v418 = vmax.f32 %v368, 0.0
    %v419 = vmax.f32 %v409, 0.0
    %v420 = vmax.f32 %v411, 0.0
    %v421 = vadd.f32 %v413, %v417
    %v422 = vrot.slane %v421, 4
    %v423 = vadd.f32 %v421, %v422
    %v424 = vrot.slane %v423, 2
    %v425 = vadd.f32 %v423, %v424
    %v426 = vrot.slane %v425, 1
    %v427 = vadd.f32 %v425, %v426
    %v428 = vadd.f32 %v414, %v418
    %v429 = vrot.slane %v428, 4
    %v430 = vadd.f32 %v428, %v429
    %v431 = vrot.slane %v430, 2
    %v432 = vadd.f32 %v430, %v431
    %v433 = vrot.slane %v432, 1
    %v434 = vadd.f32 %v432, %v433
    %v435 = vadd.f32 %v415, %v419
    %v436 = vrot.slane %v435, 4
    %v437 = vadd.f32 %v435, %v436
    %v438 = vrot.slane %v437, 2
    %v439 = vadd.f32 %v437, %v438
    %v440 = vrot.slane %v439, 1
    %v441 = vadd.f32 %v439, %v440
    %v442 = vadd.f32 %v416, %v420
    %v443 = vrot.slane %v442, 4
    %v444 = vadd.f32 %v442, %v443
    %v445 = vrot.slane %v444, 2
    %v446 = vadd.f32 %v444, %v445
    %v447 = vrot.slane %v446, 1
    %v448 = vadd.f32 %v446, %v447
    %v449 = vmul.f32 %v413, %v413
    %v450 = vmul.f32 %v414, %v414
    %v451 = vmul.f32 %v415, %v415
    %v452 = vmul.f32 %v416, %v416
    %v453 = vmul.f32 %v417, %v417
    %v454 = vmul.f32 %v418, %v418
    %v455 = vmul.f32 %v419, %v419
    %v456 = vmul.f32 %v420, %v420
    %v457 = vadd.f32 %v449, %v453
    %v458 = vrot.slane %v457, 4
    %v459 = vadd.f32 %v457, %v458
    %v460 = vrot.slane %v459, 2
    %v461 = vadd.f32 %v459, %v460
    %v462 = vrot.slane %v461, 1
    %v463 = vadd.f32 %v461, %v462
    %v464 = vadd.f32 %v450, %v454
    %v465 = vrot.slane %v464, 4
    %v466 = vadd.f32 %v464, %v465
    %v467 = vrot.slane %v466, 2
    %v468 = vadd.f32 %v466, %v467
    %v469 = vrot.slane %v468, 1
    %v470 = vadd.f32 %v468, %v469
    %v471 = vadd.f32 %v451, %v455
    %v472 = vrot.slane %v471, 4
    %v473 = vadd.f32 %v471, %v472
    %v474 = vrot.slane %v473, 2
    %v475 = vadd.f32 %v473, %v474
    %v476 = vrot.slane %v475, 1
    %v477 = vadd.f32 %v475, %v476
    %v478 = vadd.f32 %v452, %v456
    %v479 = vrot.slane %v478, 4
    %v480 = vadd.f32 %v478, %v479
    %v481 = vrot.slane %v480, 2
    %v482 = vadd.f32 %v480, %v481
    %v483 = vrot.slane %v482, 1
    %v484 = vadd.f32 %v482, %v483
    %v485 = vmul.f32 %v427, 0.0625
    %v486 = vmul.f32 %v434, 0.0625
    %v487 = vmul.f32 %v441, 0.0625
    %v488 = vmul.f32 %v448, 0.0625
    %v489 = vmul.f32 %v463, 0.0625
    %v490 = vmul.f32 %v470, 0.0625
    %v491 = vmul.f32 %v477, 0.0625
    %v492 = vmul.f32 %v484, 0.0625
    %v493 = vmul.f32 %v485, %v485
    %v494 = vmul.f32 %v486, %v486
    %v495 = vmul.f32 %v487, %v487
    %v496 = vmul.f32 %v488, %v488
    %v497 = vsub.f32 %v489, %v493
    %v498 = vsub.f32 %v490, %v494
    %v499 = vsub.f32 %v491, %v495
    %v500 = vsub.f32 %v492, %v496
    %v501 = vmax.f32 %v497, 0.0
    %v502 = vmax.f32 %v498, 0.0
    %v503 = vmax.f32 %v499, 0.0
    %v504 = vmax.f32 %v500, 0.0
    %v505 = vadd.f32 %v501, 1e-05
    %v506 = vadd.f32 %v502, 1e-05
    %v507 = vadd.f32 %v503, 1e-05
    %v508 = vadd.f32 %v504, 1e-05
    %v509 = vrsqrt.pop %v505
    %v510 = vrsqrt.pop %v506
    %v511 = vrsqrt.pop %v507
    %v512 = vrsqrt.pop %v508
    %v513 = vsub.f32 %v413, %v485
    %v514 = vsub.f32 %v414, %v486
    %v515 = vsub.f32 %v415, %v487
    %v516 = vsub.f32 %v416, %v488
    %v517 = vsub.f32 %v417, %v485
    %v518 = vsub.f32 %v418, %v486
    %v519 = vsub.f32 %v419, %v487
    %v520 = vsub.f32 %v420, %v488
    %v521 = vmul.f32 %v513, %v509
    %v522 = vmul.f32 %v514, %v510
    %v523 = vmul.f32 %v515, %v511
    %v524 = vmul.f32 %v516, %v512
    %v525 = vmul.f32 %v517, %v509
    %v526 = vmul.f32 %v518, %v510
    %v527 = vmul.f32 %v519, %v511
    %v528 = vmul.f32 %v520, %v512
    %v529 = vpack.c.bf16 %v525, %v521
    %v530 = vpack.c.bf16 %v526, %v522
    %v531 = vpack.c.bf16 %v527, %v523
    %v532 = vpack.c.bf16 %v528, %v524
    %v533 = vld [vmem:[#allocation7] sm:$0xff]
    %v534 = vld [vmem:[#allocation7 + $0x8] sm:$0xf]
    %v535 = vld [vmem:[#allocation7 + $0xc] sm:$0xff]
    %v536 = vld [vmem:[#allocation7 + $0x14] sm:$0xf]
    %v537 = vld [vmem:[#allocation7 + $0x18] sm:$0xff]
    %v538 = vld [vmem:[#allocation7 + $0x20] sm:$0xf]
    %v539 = vld [vmem:[#allocation7 + $0x24] sm:$0xff]
    %v540 = vld [vmem:[#allocation7 + $0x2c] sm:$0xf]
    %v541 = vld [vmem:[#allocation7 + $0x30] sm:$0xff]
    %v542 = vld [vmem:[#allocation7 + $0x38] sm:$0xf]
    %v543 = vld [vmem:[#allocation7 + $0x3c] sm:$0xff]
    %v544 = vld [vmem:[#allocation7 + $0x44] sm:$0xf]
    %v545 = vld [vmem:[#allocation7 + $0x48] sm:$0xff]
    %v546 = vld [vmem:[#allocation7 + $0x50] sm:$0xf]
    %v547 = vld [vmem:[#allocation7 + $0x54] sm:$0xff]
    %v548 = vld [vmem:[#allocation7 + $0x5c] sm:$0xf]
    %v549 = vld [vmem:[#allocation7 + $0x60] sm:$0xff]
    %v550 = vld [vmem:[#allocation7 + $0x68] sm:$0xf]
    %v551 = vld [vmem:[#allocation7 + $0x6c] sm:$0xff]
    %v552 = vld [vmem:[#allocation7 + $0x74] sm:$0xf]
    %v553 = vld [vmem:[#allocation7 + $0x78] sm:$0xff]
    %v554 = vld [vmem:[#allocation7 + $0x80] sm:$0xf]
    %v555 = vld [vmem:[#allocation7 + $0x84] sm:$0xff]
    %v556 = vld [vmem:[#allocation7 + $0x8c] sm:$0xf]
    %v557 = vld [vmem:[#allocation7 + $0x90] sm:$0xff]
    %v558 = vld [vmem:[#allocation7 + $0x98] sm:$0xf]
    %v559 = vld [vmem:[#allocation7 + $0x9c] sm:$0xff]
    %v560 = vld [vmem:[#allocation7 + $0xa4] sm:$0xf]
    %v561 = vld [vmem:[#allocation7 + $0xa8] sm:$0xff]
    %v562 = vld [vmem:[#allocation7 + $0xb0] sm:$0xf]
    %v563 = vld [vmem:[#allocation7 + $0xb4] sm:$0xff]
    %v564 = vld [vmem:[#allocation7 + $0xbc] sm:$0xf]
    %v565 = vld [vmem:[#allocation7 + $0xc0] sm:$0xff]
    %v566 = vld [vmem:[#allocation7 + $0xc8] sm:$0xf]
    %v567 = vld [vmem:[#allocation7 + $0xcc] sm:$0xff]
    %v568 = vld [vmem:[#allocation7 + $0xd4] sm:$0xf]
    %v569 = vld [vmem:[#allocation7 + $0xd8] sm:$0xff]
    %v570 = vld [vmem:[#allocation7 + $0xe0] sm:$0xf]
    %v571 = vld [vmem:[#allocation7 + $0xe4] sm:$0xff]
    %v572 = vld [vmem:[#allocation7 + $0xec] sm:$0xf]
    %v573 = vld [vmem:[#allocation7 + $0xf0] sm:$0xff]
    %v574 = vld [vmem:[#allocation7 + $0xf8] sm:$0xf]
    %v575 = vld [vmem:[#allocation7 + $0xfc] sm:$0xff]
    %v576 = vld [vmem:[#allocation7 + $0x104] sm:$0xf]
    %v577 = vld [vmem:[#allocation7 + $0x108] sm:$0xff]
    %v578 = vld [vmem:[#allocation7 + $0x110] sm:$0xf]
    %v579 = vld [vmem:[#allocation7 + $0x114] sm:$0xff]
    %v580 = vld [vmem:[#allocation7 + $0x11c] sm:$0xf]
    %v581 = vld [vmem:[#allocation7 + $0x120] sm:$0xff]
    %v582 = vld [vmem:[#allocation7 + $0x128] sm:$0xf]
    %v583 = vld [vmem:[#allocation7 + $0x12c] sm:$0xff]
    %v584 = vld [vmem:[#allocation7 + $0x134] sm:$0xf]
    %v585 = vld [vmem:[#allocation7 + $0x138] sm:$0xff]
    %v586 = vld [vmem:[#allocation7 + $0x140] sm:$0xf]
    %v587 = vld [vmem:[#allocation7 + $0x144] sm:$0xff]
    %v588 = vld [vmem:[#allocation7 + $0x14c] sm:$0xf]
    %v589 = vld [vmem:[#allocation7 + $0x150] sm:$0xff]
    %v590 = vld [vmem:[#allocation7 + $0x158] sm:$0xf]
    %v591 = vld [vmem:[#allocation7 + $0x15c] sm:$0xff]
    %v592 = vld [vmem:[#allocation7 + $0x164] sm:$0xf]
    %v593 = vld [vmem:[#allocation7 + $0x168] sm:$0xff]
    %v594 = vld [vmem:[#allocation7 + $0x170] sm:$0xf]
    %v595 = vld [vmem:[#allocation7 + $0x174] sm:$0xff]
    %v596 = vld [vmem:[#allocation7 + $0x17c] sm:$0xf]
    %v597 = vld [vmem:[#allocation7 + $0x180] sm:$0xff]
    %v598 = vld [vmem:[#allocation7 + $0x188] sm:$0xf]
    %v599 = vld [vmem:[#allocation7 + $0x18c] sm:$0xff]
    %v600 = vld [vmem:[#allocation7 + $0x194] sm:$0xf]
    %v601 = vld [vmem:[#allocation7 + $0x198] sm:$0xff]
    %v602 = vld [vmem:[#allocation7 + $0x1a0] sm:$0xf]
    %v603 = vld [vmem:[#allocation7 + $0x1a4] sm:$0xff]
    %v604 = vld [vmem:[#allocation7 + $0x1ac] sm:$0xf]
    %v605 = vld [vmem:[#allocation7 + $0x1b0] sm:$0xff]
    %v606 = vld [vmem:[#allocation7 + $0x1b8] sm:$0xf]
    %v607 = vld [vmem:[#allocation7 + $0x1bc] sm:$0xff]
    %v608 = vld [vmem:[#allocation7 + $0x1c4] sm:$0xf]
    %v609 = vld [vmem:[#allocation7 + $0x1c8] sm:$0xff]
    %v610 = vld [vmem:[#allocation7 + $0x1d0] sm:$0xf]
    %v611 = vld [vmem:[#allocation7 + $0x1d4] sm:$0xff]
    %v612 = vld [vmem:[#allocation7 + $0x1dc] sm:$0xf]
    %v613 = vld [vmem:[#allocation7 + $0x1e0] sm:$0xff]
    %v614 = vld [vmem:[#allocation7 + $0x1e8] sm:$0xf]
    %v615 = vld [vmem:[#allocation7 + $0x1ec] sm:$0xff]
    %v616 = vld [vmem:[#allocation7 + $0x1f4] sm:$0xf]
    %v617 = vld [vmem:[#allocation7 + $0x1f8] sm:$0xff]
    %v618 = vld [vmem:[#allocation7 + $0x200] sm:$0xf]
    %v619 = vld [vmem:[#allocation7 + $0x204] sm:$0xff]
    %v620 = vld [vmem:[#allocation7 + $0x20c] sm:$0xf]
    %v621 = vld [vmem:[#allocation7 + $0x210] sm:$0xff]
    %v622 = vld [vmem:[#allocation7 + $0x218] sm:$0xf]
    %v623 = vld [vmem:[#allocation7 + $0x21c] sm:$0xff]
    %v624 = vld [vmem:[#allocation7 + $0x224] sm:$0xf]
    %v625 = vld [vmem:[#allocation7 + $0x228] sm:$0xff]
    %v626 = vld [vmem:[#allocation7 + $0x230] sm:$0xf]
    %v627 = vld [vmem:[#allocation7 + $0x234] sm:$0xff]
    %v628 = vld [vmem:[#allocation7 + $0x23c] sm:$0xf]
    %v629 = vld [vmem:[#allocation7 + $0x240] sm:$0xff]
    %v630 = vld [vmem:[#allocation7 + $0x248] sm:$0xf]
    %v631 = vld [vmem:[#allocation7 + $0x24c] sm:$0xff]
    %v632 = vld [vmem:[#allocation7 + $0x254] sm:$0xf]
    %v633 = vld [vmem:[#allocation7 + $0x258] sm:$0xff]
    %v634 = vld [vmem:[#allocation7 + $0x260] sm:$0xf]
    %v635 = vld [vmem:[#allocation7 + $0x264] sm:$0xff]
    %v636 = vld [vmem:[#allocation7 + $0x26c] sm:$0xf]
    %v637 = vld [vmem:[#allocation7 + $0x270] sm:$0xff]
    %v638 = vld [vmem:[#allocation7 + $0x278] sm:$0xf]
    %v639 = vld [vmem:[#allocation7 + $0x27c] sm:$0xff]
    %v640 = vld [vmem:[#allocation7 + $0x284] sm:$0xf]
    %v641 = vld [vmem:[#allocation7 + $0x288] sm:$0xff]
    %v642 = vld [vmem:[#allocation7 + $0x290] sm:$0xf]
    %v643 = vld [vmem:[#allocation7 + $0x294] sm:$0xff]
    %v644 = vld [vmem:[#allocation7 + $0x29c] sm:$0xf]
    %v645 = vld [vmem:[#allocation7 + $0x2a0] sm:$0xff]
    %v646 = vld [vmem:[#allocation7 + $0x2a8] sm:$0xf]
    %v647 = vld [vmem:[#allocation7 + $0x2ac] sm:$0xff]
    %v648 = vld [vmem:[#allocation7 + $0x2b4] sm:$0xf]
    %v649 = vld [vmem:[#allocation7 + $0x2b8] sm:$0xff]
    %v650 = vld [vmem:[#allocation7 + $0x2c0] sm:$0xf]
    %v651 = vld [vmem:[#allocation7 + $0x2c4] sm:$0xff]
    %v652 = vld [vmem:[#allocation7 + $0x2cc] sm:$0xf]
    %v653 = vld [vmem:[#allocation7 + $0x2d0] sm:$0xff]
    %v654 = vld [vmem:[#allocation7 + $0x2d8] sm:$0xf]
    %v655 = vld [vmem:[#allocation7 + $0x2dc] sm:$0xff]
    %v656 = vld [vmem:[#allocation7 + $0x2e4] sm:$0xf]
    %v657 = vld [vmem:[#allocation7 + $0x2e8] sm:$0xff]
    %v658 = vld [vmem:[#allocation7 + $0x2f0] sm:$0xf]
    %v659 = vld [vmem:[#allocation7 + $0x2f4] sm:$0xff]
    %v660 = vld [vmem:[#allocation7 + $0x2fc] sm:$0xf]
    %v661 = vld [vmem:[%s4] sm:$0x7]
    %v663 = vlaneseq
    %v664 = vshrl.u32 %v663, 7
    %v665 = vsub.s32 0, %v664
    %v666 = vrot.slane %v661, %v665
    %v667 = vlaneseq
    %v668 = vshrl.u32 %v667, 7
    %v669 = vsub.s32 1, %v668
    %v670 = vrot.slane %v661, %v669
    %v671 = vlaneseq
    %v672 = vshrl.u32 %v671, 7
    %v673 = vsub.s32 2, %v672
    %v674 = vrot.slane %v661, %v673
    %v806 = vunpack.c.l.b16 %v533
    %v807 = vunpack.c.h.b16 %v533
    %v808 = vunpack.c.l.b16 %v534
    %v809 = vunpack.c.l.b16 %v535
    %v810 = vunpack.c.h.b16 %v535
    %v811 = vunpack.c.l.b16 %v536
    %v812 = vunpack.c.l.b16 %v537
    %v813 = vunpack.c.h.b16 %v537
    %v814 = vunpack.c.l.b16 %v538
    %v815 = vunpack.c.l.b16 %v539
    %v816 = vunpack.c.h.b16 %v539
    %v817 = vunpack.c.l.b16 %v540
    %v818 = vunpack.c.l.b16 %v541
    %v819 = vunpack.c.h.b16 %v541
    %v820 = vunpack.c.l.b16 %v542
    %v821 = vunpack.c.l.b16 %v543
    %v822 = vunpack.c.h.b16 %v543
    %v823 = vunpack.c.l.b16 %v544
    %v824 = vunpack.c.l.b16 %v545
    %v825 = vunpack.c.h.b16 %v545
    %v826 = vunpack.c.l.b16 %v546
    %v827 = vunpack.c.l.b16 %v547
    %v828 = vunpack.c.h.b16 %v547
    %v829 = vunpack.c.l.b16 %v548
    %v830 = vunpack.c.l.b16 %v549
    %v831 = vunpack.c.h.b16 %v549
    %v832 = vunpack.c.l.b16 %v550
    %v833 = vunpack.c.l.b16 %v551
    %v834 = vunpack.c.h.b16 %v551
    %v835 = vunpack.c.l.b16 %v552
    %v836 = vunpack.c.l.b16 %v553
    %v837 = vunpack.c.h.b16 %v553
    %v838 = vunpack.c.l.b16 %v554
    %v839 = vunpack.c.l.b16 %v555
    %v840 = vunpack.c.h.b16 %v555
    %v841 = vunpack.c.l.b16 %v556
    %v842 = vunpack.c.l.b16 %v557
    %v843 = vunpack.c.h.b16 %v557
    %v844 = vunpack.c.l.b16 %v558
    %v845 = vunpack.c.l.b16 %v559
    %v846 = vunpack.c.h.b16 %v559
    %v847 = vunpack.c.l.b16 %v560
    %v848 = vunpack.c.l.b16 %v561
    %v849 = vunpack.c.h.b16 %v561
    %v850 = vunpack.c.l.b16 %v562
    %v851 = vunpack.c.l.b16 %v563
    %v852 = vunpack.c.h.b16 %v563
    %v853 = vunpack.c.l.b16 %v564
    %v854 = vunpack.c.l.b16 %v565
    %v855 = vunpack.c.h.b16 %v565
    %v856 = vunpack.c.l.b16 %v566
    %v857 = vunpack.c.l.b16 %v567
    %v858 = vunpack.c.h.b16 %v567
    %v859 = vunpack.c.l.b16 %v568
    %v860 = vunpack.c.l.b16 %v569
    %v861 = vunpack.c.h.b16 %v569
    %v862 = vunpack.c.l.b16 %v570
    %v863 = vunpack.c.l.b16 %v571
    %v864 = vunpack.c.h.b16 %v571
    %v865 = vunpack.c.l.b16 %v572
    %v866 = vunpack.c.l.b16 %v573
    %v867 = vunpack.c.h.b16 %v573
    %v868 = vunpack.c.l.b16 %v574
    %v869 = vunpack.c.l.b16 %v575
    %v870 = vunpack.c.h.b16 %v575
    %v871 = vunpack.c.l.b16 %v576
    %v872 = vunpack.c.l.b16 %v577
    %v873 = vunpack.c.h.b16 %v577
    %v874 = vunpack.c.l.b16 %v578
    %v875 = vunpack.c.l.b16 %v579
    %v876 = vunpack.c.h.b16 %v579
    %v877 = vunpack.c.l.b16 %v580
    %v878 = vunpack.c.l.b16 %v581
    %v879 = vunpack.c.h.b16 %v581
    %v880 = vunpack.c.l.b16 %v582
    %v881 = vunpack.c.l.b16 %v583
    %v882 = vunpack.c.h.b16 %v583
    %v883 = vunpack.c.l.b16 %v584
    %v884 = vunpack.c.l.b16 %v585
    %v885 = vunpack.c.h.b16 %v585
    %v886 = vunpack.c.l.b16 %v586
    %v887 = vunpack.c.l.b16 %v587
    %v888 = vunpack.c.h.b16 %v587
    %v889 = vunpack.c.l.b16 %v588
    %v890 = vunpack.c.l.b16 %v589
    %v891 = vunpack.c.h.b16 %v589
    %v892 = vunpack.c.l.b16 %v590
    %v893 = vunpack.c.l.b16 %v591
    %v894 = vunpack.c.h.b16 %v591
    %v895 = vunpack.c.l.b16 %v592
    %v896 = vunpack.c.l.b16 %v593
    %v897 = vunpack.c.h.b16 %v593
    %v898 = vunpack.c.l.b16 %v594
    %v899 = vunpack.c.l.b16 %v595
    %v900 = vunpack.c.h.b16 %v595
    %v901 = vunpack.c.l.b16 %v596
    %v902 = vunpack.c.l.b16 %v597
    %v903 = vunpack.c.h.b16 %v597
    %v904 = vunpack.c.l.b16 %v598
    %v905 = vunpack.c.l.b16 %v599
    %v906 = vunpack.c.h.b16 %v599
    %v907 = vunpack.c.l.b16 %v600
    %v908 = vunpack.c.l.b16 %v601
    %v909 = vunpack.c.h.b16 %v601
    %v910 = vunpack.c.l.b16 %v602
    %v911 = vunpack.c.l.b16 %v603
    %v912 = vunpack.c.h.b16 %v603
    %v913 = vunpack.c.l.b16 %v604
    %v914 = vunpack.c.l.b16 %v605
    %v915 = vunpack.c.h.b16 %v605
    %v916 = vunpack.c.l.b16 %v606
    %v917 = vunpack.c.l.b16 %v607
    %v918 = vunpack.c.h.b16 %v607
    %v919 = vunpack.c.l.b16 %v608
    %v920 = vunpack.c.l.b16 %v609
    %v921 = vunpack.c.h.b16 %v609
    %v922 = vunpack.c.l.b16 %v610
    %v923 = vunpack.c.l.b16 %v611
    %v924 = vunpack.c.h.b16 %v611
    %v925 = vunpack.c.l.b16 %v612
    %v926 = vunpack.c.l.b16 %v613
    %v927 = vunpack.c.h.b16 %v613
    %v928 = vunpack.c.l.b16 %v614
    %v929 = vunpack.c.l.b16 %v615
    %v930 = vunpack.c.h.b16 %v615
    %v931 = vunpack.c.l.b16 %v616
    %v932 = vunpack.c.l.b16 %v617
    %v933 = vunpack.c.h.b16 %v617
    %v934 = vunpack.c.l.b16 %v618
    %v935 = vunpack.c.l.b16 %v619
    %v936 = vunpack.c.h.b16 %v619
    %v937 = vunpack.c.l.b16 %v620
    %v938 = vunpack.c.l.b16 %v621
    %v939 = vunpack.c.h.b16 %v621
    %v940 = vunpack.c.l.b16 %v622
    %v941 = vunpack.c.l.b16 %v623
    %v942 = vunpack.c.h.b16 %v623
    %v943 = vunpack.c.l.b16 %v624
    %v944 = vunpack.c.l.b16 %v625
    %v945 = vunpack.c.h.b16 %v625
    %v946 = vunpack.c.l.b16 %v626
    %v947 = vunpack.c.l.b16 %v627
    %v948 = vunpack.c.h.b16 %v627
    %v949 = vunpack.c.l.b16 %v628
    %v950 = vunpack.c.l.b16 %v629
    %v951 = vunpack.c.h.b16 %v629
    %v952 = vunpack.c.l.b16 %v630
    %v953 = vunpack.c.l.b16 %v631
    %v954 = vunpack.c.h.b16 %v631
    %v955 = vunpack.c.l.b16 %v632
    %v956 = vunpack.c.l.b16 %v633
    %v957 = vunpack.c.h.b16 %v633
    %v958 = vunpack.c.l.b16 %v634
    %v959 = vunpack.c.l.b16 %v635
    %v960 = vunpack.c.h.b16 %v635
    %v961 = vunpack.c.l.b16 %v636
    %v962 = vunpack.c.l.b16 %v637
    %v963 = vunpack.c.h.b16 %v637
    %v964 = vunpack.c.l.b16 %v638
    %v965 = vunpack.c.l.b16 %v639
    %v966 = vunpack.c.h.b16 %v639
    %v967 = vunpack.c.l.b16 %v640
    %v968 = vunpack.c.l.b16 %v641
    %v969 = vunpack.c.h.b16 %v641
    %v970 = vunpack.c.l.b16 %v642
    %v971 = vunpack.c.l.b16 %v643
    %v972 = vunpack.c.h.b16 %v643
    %v973 = vunpack.c.l.b16 %v644
    %v974 = vunpack.c.l.b16 %v645
    %v975 = vunpack.c.h.b16 %v645
    %v976 = vunpack.c.l.b16 %v646
    %v977 = vunpack.c.l.b16 %v647
    %v978 = vunpack.c.h.b16 %v647
    %v979 = vunpack.c.l.b16 %v648
    %v980 = vunpack.c.l.b16 %v649
    %v981 = vunpack.c.h.b16 %v649
    %v982 = vunpack.c.l.b16 %v650
    %v983 = vunpack.c.l.b16 %v651
    %v984 = vunpack.c.h.b16 %v651
    %v985 = vunpack.c.l.b16 %v652
    %v986 = vunpack.c.l.b16 %v653
    %v987 = vunpack.c.h.b16 %v653
    %v988 = vunpack.c.l.b16 %v654
    %v989 = vunpack.c.l.b16 %v655
    %v990 = vunpack.c.h.b16 %v655
    %v991 = vunpack.c.l.b16 %v656
    %v992 = vunpack.c.l.b16 %v657
    %v993 = vunpack.c.h.b16 %v657
    %v994 = vunpack.c.l.b16 %v658
    %v995 = vunpack.c.l.b16 %v659
    %v996 = vunpack.c.h.b16 %v659
    %v997 = vunpack.c.l.b16 %v660
    %v998 = vpack.c.b16 %v809, %v806
    %v999 = vpack.c.b16 %v810, %v807
    %v1000 = vpack.c.b16 %v811, %v808
    %v1001 = vpack.c.b16 %v815, %v812
    %v1002 = vpack.c.b16 %v816, %v813
    %v1003 = vpack.c.b16 %v817, %v814
    %v1004 = vpack.c.b16 %v821, %v818
    %v1005 = vpack.c.b16 %v822, %v819
    %v1006 = vpack.c.b16 %v823, %v820
    %v1007 = vpack.c.b16 %v827, %v824
    %v1008 = vpack.c.b16 %v828, %v825
    %v1009 = vpack.c.b16 %v829, %v826
    %v1010 = vpack.c.b16 %v833, %v830
    %v1011 = vpack.c.b16 %v834, %v831
    %v1012 = vpack.c.b16 %v835, %v832
    %v1013 = vpack.c.b16 %v839, %v836
    %v1014 = vpack.c.b16 %v840, %v837
    %v1015 = vpack.c.b16 %v841, %v838
    %v1016 = vpack.c.b16 %v845, %v842
    %v1017 = vpack.c.b16 %v846, %v843
    %v1018 = vpack.c.b16 %v847, %v844
    %v1019 = vpack.c.b16 %v851, %v848
    %v1020 = vpack.c.b16 %v852, %v849
    %v1021 = vpack.c.b16 %v853, %v850
    %v1022 = vpack.c.b16 %v857, %v854
    %v1023 = vpack.c.b16 %v858, %v855
    %v1024 = vpack.c.b16 %v859, %v856
    %v1025 = vpack.c.b16 %v863, %v860
    %v1026 = vpack.c.b16 %v864, %v861
    %v1027 = vpack.c.b16 %v865, %v862
    %v1028 = vpack.c.b16 %v869, %v866
    %v1029 = vpack.c.b16 %v870, %v867
    %v1030 = vpack.c.b16 %v871, %v868
    %v1031 = vpack.c.b16 %v875, %v872
    %v1032 = vpack.c.b16 %v876, %v873
    %v1033 = vpack.c.b16 %v877, %v874
    %v1034 = vpack.c.b16 %v881, %v878
    %v1035 = vpack.c.b16 %v882, %v879
    %v1036 = vpack.c.b16 %v883, %v880
    %v1037 = vpack.c.b16 %v887, %v884
    %v1038 = vpack.c.b16 %v888, %v885
    %v1039 = vpack.c.b16 %v889, %v886
    %v1040 = vpack.c.b16 %v893, %v890
    %v1041 = vpack.c.b16 %v894, %v891
    %v1042 = vpack.c.b16 %v895, %v892
    %v1043 = vpack.c.b16 %v899, %v896
    %v1044 = vpack.c.b16 %v900, %v897
    %v1045 = vpack.c.b16 %v901, %v898
    %v1046 = vpack.c.b16 %v905, %v902
    %v1047 = vpack.c.b16 %v906, %v903
    %v1048 = vpack.c.b16 %v907, %v904
    %v1049 = vpack.c.b16 %v911, %v908
    %v1050 = vpack.c.b16 %v912, %v909
    %v1051 = vpack.c.b16 %v913, %v910
    %v1052 = vpack.c.b16 %v917, %v914
    %v1053 = vpack.c.b16 %v918, %v915
    %v1054 = vpack.c.b16 %v919, %v916
    %v1055 = vpack.c.b16 %v923, %v920
    %v1056 = vpack.c.b16 %v924, %v921
    %v1057 = vpack.c.b16 %v925, %v922
    %v1058 = vpack.c.b16 %v929, %v926
    %v1059 = vpack.c.b16 %v930, %v927
    %v1060 = vpack.c.b16 %v931, %v928
    %v1061 = vpack.c.b16 %v935, %v932
    %v1062 = vpack.c.b16 %v936, %v933
    %v1063 = vpack.c.b16 %v937, %v934
    %v1064 = vpack.c.b16 %v941, %v938
    %v1065 = vpack.c.b16 %v942, %v939
    %v1066 = vpack.c.b16 %v943, %v940
    %v1067 = vpack.c.b16 %v947, %v944
    %v1068 = vpack.c.b16 %v948, %v945
    %v1069 = vpack.c.b16 %v949, %v946
    %v1070 = vpack.c.b16 %v953, %v950
    %v1071 = vpack.c.b16 %v954, %v951
    %v1072 = vpack.c.b16 %v955, %v952
    %v1073 = vpack.c.b16 %v959, %v956
    %v1074 = vpack.c.b16 %v960, %v957
    %v1075 = vpack.c.b16 %v961, %v958
    %v1076 = vpack.c.b16 %v965, %v962
    %v1077 = vpack.c.b16 %v966, %v963
    %v1078 = vpack.c.b16 %v967, %v964
    %v1079 = vpack.c.b16 %v971, %v968
    %v1080 = vpack.c.b16 %v972, %v969
    %v1081 = vpack.c.b16 %v973, %v970
    %v1082 = vpack.c.b16 %v977, %v974
    %v1083 = vpack.c.b16 %v978, %v975
    %v1084 = vpack.c.b16 %v979, %v976
    %v1085 = vpack.c.b16 %v983, %v980
    %v1086 = vpack.c.b16 %v984, %v981
    %v1087 = vpack.c.b16 %v985, %v982
    %v1088 = vpack.c.b16 %v989, %v986
    %v1089 = vpack.c.b16 %v990, %v987
    %v1090 = vpack.c.b16 %v991, %v988
    %v1091 = vpack.c.b16 %v995, %v992
    %v1092 = vpack.c.b16 %v996, %v993
    %v1093 = vpack.c.b16 %v997, %v994
    %1190 = vmatprep.subr.bf16.mxu0 %v999
    %1191 = vmatpush1.bf16.msra.mxu0 %v998
    %1192 = vmatprep.subr.bf16.mxu0 %v1002
    %1193 = vmatpush1.bf16.msra.mxu0 %v1001
    %1194 = vmatprep.subr.bf16.mxu0 %v1005
    %1195 = vmatpush1.bf16.msra.mxu0 %v1004
    %1196 = vmatprep.subr.bf16.mxu0 %v1008
    %1197 = vmatpush1.bf16.msra.mxu0 %v1007
    %1198 = vmatprep.subr.bf16.mxu0 %v1011
    %1199 = vmatpush1.bf16.msra.mxu0 %v1010
    %1200 = vmatprep.subr.bf16.mxu0 %v1014
    %1201 = vmatpush1.bf16.msra.mxu0 %v1013
    %1202 = vmatprep.subr.bf16.mxu0 %v1017
    %1203 = vmatpush1.bf16.msra.mxu0 %v1016
    %1204 = vmatprep.subr.bf16.mxu0 %v1020
    %1205 = vmatpush1.bf16.msra.mxu0 %v1019
    %1206 = vmatprep.subr.bf16.mxu0 %v1023
    %1207 = vmatpush1.bf16.msra.mxu0 %v1022
    %1208 = vmatprep.subr.bf16.mxu0 %v1026
    %1209 = vmatpush1.bf16.msra.mxu0 %v1025
    %1210 = vmatprep.subr.bf16.mxu0 %v1029
    %1211 = vmatpush1.bf16.msra.mxu0 %v1028
    %1212 = vmatprep.subr.bf16.mxu0 %v1032
    %1213 = vmatpush1.bf16.msra.mxu0 %v1031
    %1214 = vmatprep.subr.bf16.mxu0 %v1035
    %1215 = vmatpush1.bf16.msra.mxu0 %v1034
    %1216 = vmatprep.subr.bf16.mxu0 %v1038
    %1217 = vmatpush1.bf16.msra.mxu0 %v1037
    %1218 = vmatprep.subr.bf16.mxu0 %v1041
    %1219 = vmatpush1.bf16.msra.mxu0 %v1040
    %1220 = vmatprep.subr.bf16.mxu0 %v1044
    %1221 = vmatpush1.bf16.msra.mxu0 %v1043
    %1222 = vmatprep.mubr.bf16.mxu0 %v530
    %1223 = vmatmul.mubr.bf16.gmra.mrb[0].mxu0 %v529
    %v1224 = vpop.f32.mrb[0].mxu0
    %v1225 = vadd.f32 %v666, %v1224
    %v1226 = vpop.f32.mrb[0].mxu0
    %v1227 = vadd.f32 %v670, %v1226
    %v1228 = vpop.f32.mrb[0].mxu0
    %v1229 = vadd.f32 %v666, %v1228
    %v1230 = vpop.f32.mrb[0].mxu0
    %v1231 = vadd.f32 %v670, %v1230
    %1232 = vdwg.mxu0
    %1233 = vmatprep.subr.bf16.mxu0 %v1047
    %1234 = vmatpush1.bf16.msra.mxu0 %v1046
    %1235 = vmatprep.subr.bf16.mxu0 %v1050
    %1236 = vmatpush1.bf16.msra.mxu0 %v1049
    %1237 = vmatprep.subr.bf16.mxu0 %v1053
    %1238 = vmatpush1.bf16.msra.mxu0 %v1052
    %1239 = vmatprep.subr.bf16.mxu0 %v1056
    %1240 = vmatpush1.bf16.msra.mxu0 %v1055
    %1241 = vmatprep.subr.bf16.mxu0 %v1059
    %1242 = vmatpush1.bf16.msra.mxu0 %v1058
    %1243 = vmatprep.subr.bf16.mxu0 %v1062
    %1244 = vmatpush1.bf16.msra.mxu0 %v1061
    %1245 = vmatprep.subr.bf16.mxu0 %v1065
    %1246 = vmatpush1.bf16.msra.mxu0 %v1064
    %1247 = vmatprep.subr.bf16.mxu0 %v1068
    %1248 = vmatpush1.bf16.msra.mxu0 %v1067
    %1249 = vmatprep.subr.bf16.mxu0 %v1071
    %1250 = vmatpush1.bf16.msra.mxu0 %v1070
    %1251 = vmatprep.subr.bf16.mxu0 %v1074
    %1252 = vmatpush1.bf16.msra.mxu0 %v1073
    %1253 = vmatprep.subr.bf16.mxu0 %v1077
    %1254 = vmatpush1.bf16.msra.mxu0 %v1076
    %1255 = vmatprep.subr.bf16.mxu0 %v1080
    %1256 = vmatpush1.bf16.msra.mxu0 %v1079
    %1257 = vmatprep.subr.bf16.mxu0 %v1083
    %1258 = vmatpush1.bf16.msra.mxu0 %v1082
    %1259 = vmatprep.subr.bf16.mxu0 %v1086
    %1260 = vmatpush1.bf16.msra.mxu0 %v1085
    %1261 = vmatprep.subr.bf16.mxu0 %v1089
    %1262 = vmatpush1.bf16.msra.mxu0 %v1088
    %1263 = vmatprep.subr.bf16.mxu0 %v1092
    %1264 = vmatpush1.bf16.msra.mxu0 %v1091
    %1265 = vmatprep.mubr.bf16.mxu0 %v532
    %1266 = vmatmul.mubr.bf16.gmra.mrb[0].mxu0 %v531
    %v1267 = vpop.f32.mrb[0].mxu0
    %v1268 = vadd.f32 %v1225, %v1267
    %v1269 = vpop.f32.mrb[0].mxu0
    %v1270 = vadd.f32 %v1227, %v1269
    %v1271 = vpop.f32.mrb[0].mxu0
    %v1272 = vadd.f32 %v1229, %v1271
    %v1273 = vpop.f32.mrb[0].mxu0
    %v1274 = vadd.f32 %v1231, %v1273
    %1275 = vdwg.mxu0
    %1276 = vmatprep.subr.bf16.mxu0 0
    %1277 = vmatpush1.bf16.msra.mxu0 %v1000
    %1278 = vmatprep.subr.bf16.mxu0 0
    %1279 = vmatpush1.bf16.msra.mxu0 %v1003
    %1280 = vmatprep.subr.bf16.mxu0 0
    %1281 = vmatpush1.bf16.msra.mxu0 %v1006
    %1282 = vmatprep.subr.bf16.mxu0 0
    %1283 = vmatpush1.bf16.msra.mxu0 %v1009
    %1284 = vmatprep.subr.bf16.mxu0 0
    %1285 = vmatpush1.bf16.msra.mxu0 %v1012
    %1286 = vmatprep.subr.bf16.mxu0 0
    %1287 = vmatpush1.bf16.msra.mxu0 %v1015
    %1288 = vmatprep.subr.bf16.mxu0 0
    %1289 = vmatpush1.bf16.msra.mxu0 %v1018
    %1290 = vmatprep.subr.bf16.mxu0 0
    %1291 = vmatpush1.bf16.msra.mxu0 %v1021
    %1292 = vmatprep.subr.bf16.mxu0 0
    %1293 = vmatpush1.bf16.msra.mxu0 %v1024
    %1294 = vmatprep.subr.bf16.mxu0 0
    %1295 = vmatpush1.bf16.msra.mxu0 %v1027
    %1296 = vmatprep.subr.bf16.mxu0 0
    %1297 = vmatpush1.bf16.msra.mxu0 %v1030
    %1298 = vmatprep.subr.bf16.mxu0 0
    %1299 = vmatpush1.bf16.msra.mxu0 %v1033
    %1300 = vmatprep.subr.bf16.mxu0 0
    %1301 = vmatpush1.bf16.msra.mxu0 %v1036
    %1302 = vmatprep.subr.bf16.mxu0 0
    %1303 = vmatpush1.bf16.msra.mxu0 %v1039
    %1304 = vmatprep.subr.bf16.mxu0 0
    %1305 = vmatpush1.bf16.msra.mxu0 %v1042
    %1306 = vmatprep.subr.bf16.mxu0 0
    %1307 = vmatpush1.bf16.msra.mxu0 %v1045
    %1308 = vmatprep.mubr.bf16.mxu0 %v530
    %1309 = vmatmul.mubr.bf16.gmra.mrb[0].mxu0 %v529
    %v1310 = vpop.f32.mrb[0].mxu0
    %v1311 = vadd.f32 %v674, %v1310
    %v1312 = vpop.f32.mrb[0].mxu0
    %v1313 = vpop.f32.mrb[0].mxu0
    %v1314 = vadd.f32 %v674, %v1313
    %v1315 = vpop.f32.mrb[0].mxu0
    %1316 = vdwg.mxu0
    %1317 = vmatprep.subr.bf16.mxu0 0
    %1318 = vmatpush1.bf16.msra.mxu0 %v1048
    %1319 = vmatprep.subr.bf16.mxu0 0
    %1320 = vmatpush1.bf16.msra.mxu0 %v1051
    %1321 = vmatprep.subr.bf16.mxu0 0
    %1322 = vmatpush1.bf16.msra.mxu0 %v1054
    %1323 = vmatprep.subr.bf16.mxu0 0
    %1324 = vmatpush1.bf16.msra.mxu0 %v1057
    %1325 = vmatprep.subr.bf16.mxu0 0
    %1326 = vmatpush1.bf16.msra.mxu0 %v1060
    %1327 = vmatprep.subr.bf16.mxu0 0
    %1328 = vmatpush1.bf16.msra.mxu0 %v1063
    %1329 = vmatprep.subr.bf16.mxu0 0
    %1330 = vmatpush1.bf16.msra.mxu0 %v1066
    %1331 = vmatprep.subr.bf16.mxu0 0
    %1332 = vmatpush1.bf16.msra.mxu0 %v1069
    %1333 = vmatprep.subr.bf16.mxu0 0
    %1334 = vmatpush1.bf16.msra.mxu0 %v1072
    %1335 = vmatprep.subr.bf16.mxu0 0
    %1336 = vmatpush1.bf16.msra.mxu0 %v1075
    %1337 = vmatprep.subr.bf16.mxu0 0
    %1338 = vmatpush1.bf16.msra.mxu0 %v1078
    %1339 = vmatprep.subr.bf16.mxu0 0
    %1340 = vmatpush1.bf16.msra.mxu0 %v1081
    %1341 = vmatprep.subr.bf16.mxu0 0
    %1342 = vmatpush1.bf16.msra.mxu0 %v1084
    %1343 = vmatprep.subr.bf16.mxu0 0
    %1344 = vmatpush1.bf16.msra.mxu0 %v1087
    %1345 = vmatprep.subr.bf16.mxu0 0
    %1346 = vmatpush1.bf16.msra.mxu0 %v1090
    %1347 = vmatprep.subr.bf16.mxu0 0
    %1348 = vmatpush1.bf16.msra.mxu0 %v1093
    %1349 = vmatprep.mubr.bf16.mxu0 %v532
    %1350 = vmatmul.mubr.bf16.gmra.mrb[0].mxu0 %v531
    %v1351 = vpop.f32.mrb[0].mxu0
    %v1352 = vadd.f32 %v1311, %v1351
    %v1353 = vpop.f32.mrb[0].mxu0
    %v1354 = vpop.f32.mrb[0].mxu0
    %v1355 = vadd.f32 %v1314, %v1354
    %v1356 = vpop.f32.mrb[0].mxu0
    %1357 = vdwg.mxu0
    %v1358 = vmax.f32 %v1268, 0.0
    %v1359 = vmax.f32 %v1270, 0.0
    %v1360 = vmax.f32 %v1352, 0.0
    %v1361 = vmax.f32 %v1272, 0.0
    %v1362 = vmax.f32 %v1274, 0.0
    %v1363 = vmax.f32 %v1355, 0.0
    %v1364 = vadd.f32 %v1358, %v1361
    %v1365 = vrot.slane %v1364, 4
    %v1366 = vadd.f32 %v1364, %v1365
    %v1367 = vrot.slane %v1366, 2
    %v1368 = vadd.f32 %v1366, %v1367
    %v1369 = vrot.slane %v1368, 1
    %v1370 = vadd.f32 %v1368, %v1369
    %v1371 = vadd.f32 %v1359, %v1362
    %v1372 = vrot.slane %v1371, 4
    %v1373 = vadd.f32 %v1371, %v1372
    %v1374 = vrot.slane %v1373, 2
    %v1375 = vadd.f32 %v1373, %v1374
    %v1376 = vrot.slane %v1375, 1
    %v1377 = vadd.f32 %v1375, %v1376
    %v1378 = vadd.f32 %v1360, %v1363
    %v1379 = vrot.slane %v1378, 4
    %v1380 = vadd.f32 %v1378, %v1379
    %v1381 = vrot.slane %v1380, 2
    %v1382 = vadd.f32 %v1380, %v1381
    %v1383 = vrot.slane %v1382, 1
    %v1384 = vadd.f32 %v1382, %v1383
    %v1385 = vmul.f32 %v1358, %v1358
    %v1386 = vmul.f32 %v1359, %v1359
    %v1387 = vmul.f32 %v1360, %v1360
    %v1388 = vmul.f32 %v1361, %v1361
    %v1389 = vmul.f32 %v1362, %v1362
    %v1390 = vmul.f32 %v1363, %v1363
    %v1391 = vadd.f32 %v1385, %v1388
    %v1392 = vrot.slane %v1391, 4
    %v1393 = vadd.f32 %v1391, %v1392
    %v1394 = vrot.slane %v1393, 2
    %v1395 = vadd.f32 %v1393, %v1394
    %v1396 = vrot.slane %v1395, 1
    %v1397 = vadd.f32 %v1395, %v1396
    %v1398 = vadd.f32 %v1386, %v1389
    %v1399 = vrot.slane %v1398, 4
    %v1400 = vadd.f32 %v1398, %v1399
    %v1401 = vrot.slane %v1400, 2
    %v1402 = vadd.f32 %v1400, %v1401
    %v1403 = vrot.slane %v1402, 1
    %v1404 = vadd.f32 %v1402, %v1403
    %v1405 = vadd.f32 %v1387, %v1390
    %v1406 = vrot.slane %v1405, 4
    %v1407 = vadd.f32 %v1405, %v1406
    %v1408 = vrot.slane %v1407, 2
    %v1409 = vadd.f32 %v1407, %v1408
    %v1410 = vrot.slane %v1409, 1
    %v1411 = vadd.f32 %v1409, %v1410
    %v1412 = vmul.f32 %v1370, 0.0625
    %v1413 = vmul.f32 %v1377, 0.0625
    %v1414 = vmul.f32 %v1384, 0.0625
    %v1415 = vmul.f32 %v1397, 0.0625
    %v1416 = vmul.f32 %v1404, 0.0625
    %v1417 = vmul.f32 %v1411, 0.0625
    %v1418 = vmul.f32 %v1412, %v1412
    %v1419 = vmul.f32 %v1413, %v1413
    %v1420 = vmul.f32 %v1414, %v1414
    %v1421 = vsub.f32 %v1415, %v1418
    %v1422 = vsub.f32 %v1416, %v1419
    %v1423 = vsub.f32 %v1417, %v1420
    %v1424 = vmax.f32 %v1421, 0.0
    %v1425 = vmax.f32 %v1422, 0.0
    %v1426 = vmax.f32 %v1423, 0.0
    %v1427 = vadd.f32 %v1424, 1e-05
    %v1428 = vadd.f32 %v1425, 1e-05
    %v1429 = vadd.f32 %v1426, 1e-05
    %v1430 = vrsqrt.pop %v1427
    %v1431 = vrsqrt.pop %v1428
    %v1432 = vrsqrt.pop %v1429
    %v1433 = vsub.f32 %v1358, %v1412
    %v1434 = vsub.f32 %v1359, %v1413
    %v1435 = vsub.f32 %v1360, %v1414
    %v1436 = vsub.f32 %v1361, %v1412
    %v1437 = vsub.f32 %v1362, %v1413
    %v1438 = vsub.f32 %v1363, %v1414
    %v1439 = vmul.f32 %v1433, %v1430
    %v1440 = vmul.f32 %v1434, %v1431
    %v1441 = vmul.f32 %v1435, %v1432
    %v1442 = vmul.f32 %v1436, %v1430
    %v1443 = vmul.f32 %v1437, %v1431
    %v1444 = vmul.f32 %v1438, %v1432
    %v1445 = vpack.c.bf16 %v1442, %v1439
    %v1446 = vpack.c.bf16 %v1443, %v1440
    %v1447 = vpack.c.bf16 %v1444, %v1441
    %v1448 = vld [vmem:[#allocation8] sm:$0xf]
    %v1449 = vld [vmem:[#allocation8 + $0x4] sm:$0xf]
    %v1450 = vld [vmem:[#allocation8 + $0x8] sm:$0xf]
    %v1451 = vld [vmem:[#allocation8 + $0xc] sm:$0xf]
    %v1452 = vld [vmem:[#allocation8 + $0x10] sm:$0xf]
    %v1453 = vld [vmem:[#allocation8 + $0x14] sm:$0xf]
    %v1454 = vld [vmem:[#allocation8 + $0x18] sm:$0xf]
    %v1455 = vld [vmem:[#allocation8 + $0x1c] sm:$0xf]
    %v1456 = vld [vmem:[#allocation8 + $0x20] sm:$0xf]
    %v1457 = vld [vmem:[#allocation8 + $0x24] sm:$0xf]
    %v1458 = vld [vmem:[#allocation8 + $0x28] sm:$0xf]
    %v1459 = vld [vmem:[#allocation8 + $0x2c] sm:$0xf]
    %v1460 = vld [vmem:[#allocation8 + $0x30] sm:$0xf]
    %v1461 = vld [vmem:[#allocation8 + $0x34] sm:$0xf]
    %v1462 = vld [vmem:[#allocation8 + $0x38] sm:$0xf]
    %v1463 = vld [vmem:[#allocation8 + $0x3c] sm:$0xf]
    %v1464 = vld [vmem:[#allocation8 + $0x40] sm:$0xf]
    %v1465 = vld [vmem:[#allocation8 + $0x44] sm:$0xf]
    %v1466 = vld [vmem:[#allocation8 + $0x48] sm:$0xf]
    %v1467 = vld [vmem:[#allocation8 + $0x4c] sm:$0xf]
    %v1468 = vld [vmem:[#allocation8 + $0x50] sm:$0xf]
    %v1469 = vld [vmem:[#allocation8 + $0x54] sm:$0xf]
    %v1470 = vld [vmem:[#allocation8 + $0x58] sm:$0xf]
    %v1471 = vld [vmem:[#allocation8 + $0x5c] sm:$0xf]
    %v1472 = vld [vmem:[#allocation8 + $0x60] sm:$0xf]
    %v1473 = vld [vmem:[#allocation8 + $0x64] sm:$0xf]
    %v1474 = vld [vmem:[#allocation8 + $0x68] sm:$0xf]
    %v1475 = vld [vmem:[#allocation8 + $0x6c] sm:$0xf]
    %v1476 = vld [vmem:[#allocation8 + $0x70] sm:$0xf]
    %v1477 = vld [vmem:[#allocation8 + $0x74] sm:$0xf]
    %v1478 = vld [vmem:[#allocation8 + $0x78] sm:$0xf]
    %v1479 = vld [vmem:[#allocation8 + $0x7c] sm:$0xf]
    %v1480 = vld [vmem:[#allocation8 + $0x80] sm:$0xf]
    %v1481 = vld [vmem:[#allocation8 + $0x84] sm:$0xf]
    %v1482 = vld [vmem:[#allocation8 + $0x88] sm:$0xf]
    %v1483 = vld [vmem:[#allocation8 + $0x8c] sm:$0xf]
    %v1484 = vld [vmem:[#allocation8 + $0x90] sm:$0xf]
    %v1485 = vld [vmem:[#allocation8 + $0x94] sm:$0xf]
    %v1486 = vld [vmem:[#allocation8 + $0x98] sm:$0xf]
    %v1487 = vld [vmem:[#allocation8 + $0x9c] sm:$0xf]
    %v1488 = vld [vmem:[#allocation8 + $0xa0] sm:$0xf]
    %v1489 = vld [vmem:[#allocation8 + $0xa4] sm:$0xf]
    %v1490 = vld [vmem:[#allocation8 + $0xa8] sm:$0xf]
    %v1491 = vld [vmem:[#allocation8 + $0xac] sm:$0xf]
    %v1492 = vld [vmem:[#allocation8 + $0xb0] sm:$0xf]
    %v1493 = vld [vmem:[#allocation8 + $0xb4] sm:$0xf]
    %v1494 = vld [vmem:[#allocation8 + $0xb8] sm:$0xf]
    %v1495 = vld [vmem:[#allocation8 + $0xbc] sm:$0xf]
    %v1496 = vld [vmem:[%s6] sm:$0x1]
    %v1498 = vlaneseq
    %v1499 = vshrl.u32 %v1498, 7
    %v1500 = vsub.s32 0, %v1499
    %v1501 = vrot.slane %v1496, %v1500
    %v1551 = vunpack.c.l.b16 %v1448
    %v1552 = vunpack.c.l.b16 %v1449
    %v1553 = vunpack.c.l.b16 %v1450
    %v1554 = vunpack.c.l.b16 %v1451
    %v1555 = vunpack.c.l.b16 %v1452
    %v1556 = vunpack.c.l.b16 %v1453
    %v1557 = vunpack.c.l.b16 %v1454
    %v1558 = vunpack.c.l.b16 %v1455
    %v1559 = vunpack.c.l.b16 %v1456
    %v1560 = vunpack.c.l.b16 %v1457
    %v1561 = vunpack.c.l.b16 %v1458
    %v1562 = vunpack.c.l.b16 %v1459
    %v1563 = vunpack.c.l.b16 %v1460
    %v1564 = vunpack.c.l.b16 %v1461
    %v1565 = vunpack.c.l.b16 %v1462
    %v1566 = vunpack.c.l.b16 %v1463
    %v1567 = vunpack.c.l.b16 %v1464
    %v1568 = vunpack.c.l.b16 %v1465
    %v1569 = vunpack.c.l.b16 %v1466
    %v1570 = vunpack.c.l.b16 %v1467
    %v1571 = vunpack.c.l.b16 %v1468
    %v1572 = vunpack.c.l.b16 %v1469
    %v1573 = vunpack.c.l.b16 %v1470
    %v1574 = vunpack.c.l.b16 %v1471
    %v1575 = vunpack.c.l.b16 %v1472
    %v1576 = vunpack.c.l.b16 %v1473
    %v1577 = vunpack.c.l.b16 %v1474
    %v1578 = vunpack.c.l.b16 %v1475
    %v1579 = vunpack.c.l.b16 %v1476
    %v1580 = vunpack.c.l.b16 %v1477
    %v1581 = vunpack.c.l.b16 %v1478
    %v1582 = vunpack.c.l.b16 %v1479
    %v1583 = vunpack.c.l.b16 %v1480
    %v1584 = vunpack.c.l.b16 %v1481
    %v1585 = vunpack.c.l.b16 %v1482
    %v1586 = vunpack.c.l.b16 %v1483
    %v1587 = vunpack.c.l.b16 %v1484
    %v1588 = vunpack.c.l.b16 %v1485
    %v1589 = vunpack.c.l.b16 %v1486
    %v1590 = vunpack.c.l.b16 %v1487
    %v1591 = vunpack.c.l.b16 %v1488
    %v1592 = vunpack.c.l.b16 %v1489
    %v1593 = vunpack.c.l.b16 %v1490
    %v1594 = vunpack.c.l.b16 %v1491
    %v1595 = vunpack.c.l.b16 %v1492
    %v1596 = vunpack.c.l.b16 %v1493
    %v1597 = vunpack.c.l.b16 %v1494
    %v1598 = vunpack.c.l.b16 %v1495
    %v1599 = vpack.c.b16 %v1552, %v1551
    %v1600 = vpack.c.b16 %v1554, %v1553
    %v1601 = vpack.c.b16 %v1556, %v1555
    %v1602 = vpack.c.b16 %v1558, %v1557
    %v1603 = vpack.c.b16 %v1560, %v1559
    %v1604 = vpack.c.b16 %v1562, %v1561
    %v1605 = vpack.c.b16 %v1564, %v1563
    %v1606 = vpack.c.b16 %v1566, %v1565
    %v1607 = vpack.c.b16 %v1568, %v1567
    %v1608 = vpack.c.b16 %v1570, %v1569
    %v1609 = vpack.c.b16 %v1572, %v1571
    %v1610 = vpack.c.b16 %v1574, %v1573
    %v1611 = vpack.c.b16 %v1576, %v1575
    %v1612 = vpack.c.b16 %v1578, %v1577
    %v1613 = vpack.c.b16 %v1580, %v1579
    %v1614 = vpack.c.b16 %v1582, %v1581
    %v1615 = vpack.c.b16 %v1584, %v1583
    %v1616 = vpack.c.b16 %v1586, %v1585
    %v1617 = vpack.c.b16 %v1588, %v1587
    %v1618 = vpack.c.b16 %v1590, %v1589
    %v1619 = vpack.c.b16 %v1592, %v1591
    %v1620 = vpack.c.b16 %v1594, %v1593
    %v1621 = vpack.c.b16 %v1596, %v1595
    %v1622 = vpack.c.b16 %v1598, %v1597
    %1647 = vmatprep.subr.bf16.mxu0 0
    %1648 = vmatpush1.bf16.msra.mxu0 %v1599
    %1649 = vmatprep.subr.bf16.mxu0 0
    %1650 = vmatpush1.bf16.msra.mxu0 %v1600
    %1651 = vmatprep.subr.bf16.mxu0 0
    %1652 = vmatpush1.bf16.msra.mxu0 %v1601
    %1653 = vmatprep.subr.bf16.mxu0 0
    %1654 = vmatpush1.bf16.msra.mxu0 %v1602
    %1655 = vmatprep.subr.bf16.mxu0 0
    %1656 = vmatpush1.bf16.msra.mxu0 %v1603
    %1657 = vmatprep.subr.bf16.mxu0 0
    %1658 = vmatpush1.bf16.msra.mxu0 %v1604
    %1659 = vmatprep.subr.bf16.mxu0 0
    %1660 = vmatpush1.bf16.msra.mxu0 %v1605
    %1661 = vmatprep.subr.bf16.mxu0 0
    %1662 = vmatpush1.bf16.msra.mxu0 %v1606
    %1663 = vmatprep.subr.bf16.mxu0 0
    %1664 = vmatpush1.bf16.msra.mxu0 %v1607
    %1665 = vmatprep.subr.bf16.mxu0 0
    %1666 = vmatpush1.bf16.msra.mxu0 %v1608
    %1667 = vmatprep.subr.bf16.mxu0 0
    %1668 = vmatpush1.bf16.msra.mxu0 %v1609
    %1669 = vmatprep.subr.bf16.mxu0 0
    %1670 = vmatpush1.bf16.msra.mxu0 %v1610
    %1671 = vmatprep.subr.bf16.mxu0 0
    %1672 = vmatpush1.bf16.msra.mxu0 %v1611
    %1673 = vmatprep.subr.bf16.mxu0 0
    %1674 = vmatpush1.bf16.msra.mxu0 %v1612
    %1675 = vmatprep.subr.bf16.mxu0 0
    %1676 = vmatpush1.bf16.msra.mxu0 %v1613
    %1677 = vmatprep.subr.bf16.mxu0 0
    %1678 = vmatpush1.bf16.msra.mxu0 %v1614
    %1679 = vmatprep.mubr.bf16.mxu0 %v1446
    %1680 = vmatmul.mubr.bf16.gmra.mrb[0].mxu0 %v1445
    %v1681 = vpop.f32.mrb[0].mxu0
    %v1682 = vadd.f32 %v1501, %v1681
    %v1683 = vpop.f32.mrb[0].mxu0
    %v1684 = vpop.f32.mrb[0].mxu0
    %v1685 = vadd.f32 %v1501, %v1684
    %v1686 = vpop.f32.mrb[0].mxu0
    %1687 = vdwg.mxu0
    %1688 = vmatprep.subr.bf16.mxu0 0
    %1689 = vmatpush1.bf16.msra.mxu0 %v1615
    %1690 = vmatprep.subr.bf16.mxu0 0
    %1691 = vmatpush1.bf16.msra.mxu0 %v1616
    %1692 = vmatprep.subr.bf16.mxu0 0
    %1693 = vmatpush1.bf16.msra.mxu0 %v1617
    %1694 = vmatprep.subr.bf16.mxu0 0
    %1695 = vmatpush1.bf16.msra.mxu0 %v1618
    %1696 = vmatprep.subr.bf16.mxu0 0
    %1697 = vmatpush1.bf16.msra.mxu0 %v1619
    %1698 = vmatprep.subr.bf16.mxu0 0
    %1699 = vmatpush1.bf16.msra.mxu0 %v1620
    %1700 = vmatprep.subr.bf16.mxu0 0
    %1701 = vmatpush1.bf16.msra.mxu0 %v1621
    %1702 = vmatprep.subr.bf16.mxu0 0
    %1703 = vmatpush1.bf16.msra.mxu0 %v1622
    %1704 = vmatprep.subr.bf16.mxu0 0
    %1705 = vmatpush1.bf16.msra.mxu0 0
    %1706 = vmatprep.subr.bf16.mxu0 0
    %1707 = vmatpush1.bf16.msra.mxu0 0
    %1708 = vmatprep.subr.bf16.mxu0 0
    %1709 = vmatpush1.bf16.msra.mxu0 0
    %1710 = vmatprep.subr.bf16.mxu0 0
    %1711 = vmatpush1.bf16.msra.mxu0 0
    %1712 = vmatprep.subr.bf16.mxu0 0
    %1713 = vmatpush1.bf16.msra.mxu0 0
    %1714 = vmatprep.subr.bf16.mxu0 0
    %1715 = vmatpush1.bf16.msra.mxu0 0
    %1716 = vmatprep.subr.bf16.mxu0 0
    %1717 = vmatpush1.bf16.msra.mxu0 0
    %1718 = vmatprep.subr.bf16.mxu0 0
    %1719 = vmatpush1.bf16.msra.mxu0 0
    %1720 = vmatprep.mubr.bf16.mxu0 0
    %1721 = vmatmul.mubr.bf16.gmra.mrb[0].mxu0 %v1447
    %v1722 = vpop.f32.mrb[0].mxu0
    %v1723 = vadd.f32 %v1682, %v1722
    %v1724 = vpop.f32.mrb[0].mxu0
    %v1725 = vpop.f32.mrb[0].mxu0
    %v1726 = vadd.f32 %v1685, %v1725
    %v1727 = vpop.f32.mrb[0].mxu0
    %1728 = vdwg.mxu0
    %v1729 = vtanh.pop %v1723
    %v1730 = vtanh.pop %v1726
    %1731 = vst [vmem:[#allocation10] sm:$0xff] %v1729
    %1732 = vst [vmem:[#allocation10 + $0x8] sm:$0xff] %v1730
    // Predicated region
    $region46: #{tpu_custom_call.1} parent=1 // pred_check
      _
    $region47: #{tpu_custom_call.1} parent=1 // pred_check_branch
      %1734 = sbr.rel (0) target = $region49
    $region48: #{tpu_custom_call.1} parent=1 // pred_region
      %s1736 = ssub.s32 256, 256
      %1737 = vsyncadd [#allocation4], %s1736
      %s1738 = sshll.u32 [#allocation10], 4
      %s1739 = int_to_ptr.vmem [resolvable:$true] %s1738
      %1744 = dma.vmem_to_hbm [thread:$0]  %s1739, 256, %s7, [#allocation4], 128, 128, 8
    $region49: #{tpu_custom_call.1} parent=1 // pred_fallthru
      _
    // Predicated region
    $region50: #{tpu_custom_call.1} parent=1 // pred_check
      _
    $region51: #{tpu_custom_call.1} parent=1 // pred_check_branch
      %1746 = sbr.rel (0) target = $region53
    $region52: #{tpu_custom_call.1} parent=1 // pred_region
      %1747 = dma.done [#allocation4], 256
    $region53: #{tpu_custom_call.1} parent=1 // pred_fallthru
      _
    %1748 = vsyncpa [#allocation3], 1
    %1749 = vsyncpa [#allocation6], 1
    %1750 = vsyncpa [#allocation9], 1
    %1751 = vsyncpa [#allocation4], 1

</llo_original>
